<compile_context>
chip_gen: v5e
topology: v5e:2x2
jax: 0.10.0
libtpu: 0.0.40
codegen_flags: <defaults>
</compile_context>

<pallas_src>
import functools

import numpy as np
import jax
import jax.numpy as jnp
from jax import lax
from jax.experimental import pallas as pl
from jax.experimental.pallas import tpu as pltpu

KSIZE = 7
PAD = 3  # padding = 3 for kernel_size 7


def _round_up(a, b):
    return (a + b - 1) // b * b


def _tree_sum(xs):
    while len(xs) > 1:
        nxt = [xs[i] + xs[i + 1] for i in range(0, len(xs) - 1, 2)]
        if len(xs) % 2:
            nxt.append(xs[-1])
        xs = nxt
    return xs[0]


def _spatial_attention_kernel(x_ref, mask_ref, w_ref, o_ref, *, nb, C, H, W, HWp, ck):
    """One grid step processes `nb` images, fully lane-dense.

    x_ref:    (nb, C, HWp)     input block (VMEM), HWp = round_up(H*W, 128)
    mask_ref: (2*7, HWp)       rows 0..6: column-validity masks, 7..13: row masks (f32)
    w_ref:    (2*7*7,)         conv weight flattened [c, ky, kx] (SMEM, scalar reads)
    o_ref:    (nb, C, HWp)     output block (VMEM)
    """
    f32 = jnp.float32
    n_chunks = C // ck  # ck divides C (else ck == C and n_chunks == 1)

    # ------------- fused channel mean + max: one chunked pass over C -------------
    if n_chunks == 1:
        xf = x_ref[...].astype(f32)                       # (nb, C, HWp)
        csum = jnp.sum(xf, axis=1)                        # (nb, HWp)
        cmax = jnp.max(xf, axis=1)
    else:
        def reduce_body(k, carry):
            s, m = carry
            c0 = pl.multiple_of(k * ck, ck)
            chunk = x_ref[:, pl.ds(c0, ck), :].astype(f32)        # (nb, ck, HWp)
            return (s + jnp.sum(chunk, axis=1),
                    jnp.maximum(m, jnp.max(chunk, axis=1)))
        csum, cmax = lax.fori_loop(
            0, n_chunks, reduce_body,
            (jnp.zeros((nb, HWp), f32), jnp.full((nb, HWp), -jnp.inf, f32)),
            unroll=n_chunks <= 4)
    avg = csum * (1.0 / C)                                # (nb, HWp)

    # ------------- 7x7 conv (2 -> 1 ch) on flat maps: rolls + boundary masks ------
    # Precomputed masks (from the wrapper): validity of the tap at each OUTPUT index.
    col_mask = [mask_ref[dx:dx + 1, :] for dx in range(KSIZE)]            # (1, HWp)
    row_mask = [mask_ref[KSIZE + dy:KSIZE + dy + 1, :] for dy in range(KSIZE)]

    def dx_shifted(m):
        # shifted[dx][i] = m[i + dx - PAD], already column-masked (zero padding).
        out = []
        for dx in range(KSIZE):
            sh = (PAD - dx) % HWp
            r = m if sh == 0 else pltpu.roll(m, sh, axis=1)
            out.append(r * col_mask[dx])
        return out

    cs_avg = dx_shifted(avg)      # 7 x (nb, HWp)
    cs_max = dx_shifted(cmax)     # 7 x (nb, HWp)

    dy_terms = []
    for dy in range(KSIZE):
        taps = []
        for dx in range(KSIZE):
            w_a = w_ref[dy * KSIZE + dx]                       # avg channel (c = 0)
            w_m = w_ref[KSIZE * KSIZE + dy * KSIZE + dx]       # max channel (c = 1)
            taps.append(cs_avg[dx] * w_a + cs_max[dx] * w_m)
        g = _tree_sum(taps)                                    # (nb, HWp)
        sh = ((PAD - dy) * W) % HWp                            # g_shift[i] = g[i + (dy-PAD)*W]
        g = g if sh == 0 else pltpu.roll(g, sh, axis=1)
        dy_terms.append(g * row_mask[dy])
    attn = jax.nn.sigmoid(_tree_sum(dy_terms))                 # (nb, HWp) f32

    # ------------- broadcast multiply in the input dtype, chunked store ----------
    attn_x = attn.astype(o_ref.dtype)[:, None, :]              # (nb, 1, HWp)
    if n_chunks == 1:
        o_ref[...] = attn_x * x_ref[...]
    else:
        @pl.loop(0, n_chunks)
        def _(k):
            c0 = pl.multiple_of(k * ck, ck)
            sl = pl.ds(c0, ck)
            o_ref[:, sl, :] = attn_x * x_ref[:, sl, :]


def _tpu_vmem_and_cores():
    try:
        vmem = int(pltpu.get_tpu_info().vmem_capacity_bytes)
    except Exception:
        vmem = 128 << 20
    # v7x: 64 MiB VMEM per TensorCore, 2 TCs/chip; v5e/v6e: 128 MiB, 1 TC.
    n_tc = 2 if vmem <= (64 << 20) else 1
    return vmem, n_tc


def _pick_ck(C):
    # Largest sublane-multiple channel chunk that divides C; fall back to a single read.
    for ck in range(64, 7, -8):
        if C % ck == 0:
            return ck
    return C


def _pick_nb(N, per_image_bytes, n_tc):
    cap = (6 << 20) if n_tc == 2 else (8 << 20)
    divs = [d for d in range(1, N + 1) if N % d == 0]
    fits = [d for d in divs if d * per_image_bytes <= cap] or [1]
    if n_tc == 1:
        return max(fits)                       # single TC: biggest block, no step rule
    even = [d for d in fits if (N // d) % 2 == 0]
    if even:
        return max(even)                       # balanced work across the 2 TensorCores
    multi = [d for d in fits if N // d >= 2]
    return max(multi) if multi else max(fits)


def spatial_attention(x, w):
    """x: (N, C, H, W), w: (1, 2, 7, 7) -> (N, C, H, W). Matches SpatialAttention.forward."""
    N, C, H, W = x.shape
    assert w.shape == (1, 2, KSIZE, KSIZE)
    HW = H * W
    HWp = max(128, _round_up(HW, 128))          # lane-dense, unmasked loads/stores

    x_flat = x.reshape(N, C, HW)
    if HWp != HW:
        x_flat = jnp.pad(x_flat, ((0, 0), (0, 0), (0, HWp - HW)))
    w_flat = w.reshape(2 * KSIZE * KSIZE).astype(jnp.float32)

    # Precomputed tap-validity masks (host-side constants, passed as a small input).
    idx = np.arange(HWp)
    row_np = idx // W
    col_np = idx % W
    masks_np = np.zeros((2 * KSIZE, HWp), np.float32)
    for dx in range(KSIZE):
        masks_np[dx] = ((col_np + dx - PAD >= 0) & (col_np + dx - PAD < W))
    for dy in range(KSIZE):
        masks_np[KSIZE + dy] = ((row_np + dy - PAD >= 0) & (row_np + dy - PAD < H))
    masks = jnp.asarray(masks_np)

    vmem_cap, n_tc = _tpu_vmem_and_cores()
    per_image = C * HWp * x.dtype.itemsize
    nb = _pick_nb(N, per_image, n_tc)
    grid = (N // nb,)
    ck = _pick_ck(C)

    block_bytes = nb * per_image
    need = 4 * block_bytes + (4 << 20)          # double-buffered in+out + masks + headroom
    cap = vmem_cap - (8 << 20)
    vmem_limit = int(max(16 << 20, min(need, cap)))

    kernel = functools.partial(_spatial_attention_kernel,
                               nb=nb, C=C, H=H, W=W, HWp=HWp, ck=ck)
    out_flat = pl.pallas_call(
        kernel,
        out_shape=jax.ShapeDtypeStruct((N, C, HWp), x.dtype),
        grid_spec=pltpu.PrefetchScalarGridSpec(
            num_scalar_prefetch=0,
            grid=grid,
            in_specs=[
                pl.BlockSpec((nb, C, HWp), lambda i: (i, 0, 0)),
                pl.BlockSpec((2 * KSIZE, HWp), lambda i: (0, 0)),
                pl.BlockSpec(memory_space=pltpu.MemorySpace.SMEM),
            ],
            out_specs=pl.BlockSpec((nb, C, HWp), lambda i: (i, 0, 0)),
        ),
        compiler_params=pltpu.CompilerParams(
            dimension_semantics=("parallel",),
            vmem_limit_bytes=vmem_limit,
        ),
    )(x_flat, masks, w_flat)
    return out_flat[:, :, :HW].reshape(N, C, H, W)


def _reference(x, w):
    """Plain-JAX reference matching the PyTorch forward exactly."""
    avg_out = jnp.mean(x, axis=1, keepdims=True)
    max_out = jnp.max(x, axis=1, keepdims=True)
    y = jnp.concatenate([avg_out, max_out], axis=1)       # (N, 2, H, W)
    y = jax.lax.conv_general_dilated(
        y, w, window_strides=(1, 1), padding=((PAD, PAD), (PAD, PAD)),
        dimension_numbers=("NCHW", "OIHW", "NCHW"))
    y = jax.nn.sigmoid(y)                                  # (N, 1, H, W)
    return y * x


if __name__ == "__main__":
    key = jax.random.PRNGKey(0)
    kx, kw = jax.random.split(key)

    N, C, H, W = 2, 4, 16, 16
    x = jax.random.normal(kx, (N, C, H, W), dtype=jnp.float32)
    # Deterministic synthetic conv weight: nn.Conv2d(2, 1, 7, bias=False)
    conv_w = jax.random.normal(kw, (1, 2, KSIZE, KSIZE), dtype=jnp.float32) * 0.05

    out = spatial_attention(x, conv_w)
    out = jax.block_until_ready(out)

    ref = _reference(x, conv_w)
    assert out.shape == (N, C, H, W)
    assert jnp.allclose(out, ref, atol=1e-5, rtol=1e-5), "mismatch vs reference"

    print("KERNEL_OK")
</pallas_src>

<mosaic_0001>
module attributes {stable_mosaic.version = 11 : i64} {
  func.func @_spatial_attention_kernel(%arg0: i32, %arg1: memref<2x4x256xf32, #tpu.memory_space<vmem>>, %arg2: memref<14x256xf32, #tpu.memory_space<vmem>>, %arg3: memref<98xf32, #tpu.memory_space<smem>>, %arg4: memref<2x4x256xf32, #tpu.memory_space<vmem>>) attributes {dimension_semantics = [#tpu.dimension_semantics<parallel>], iteration_bounds = array<i64: 1>, scalar_prefetch = 0 : i64, scratch_operands = 0 : i64, tpu.core_type = #tpu.core_type<tc>, window_params = [{transform_indices = @transform_0, window_bounds = array<i64: 2, 4, 256>}, {pipeline_mode = #tpu.pipeline_mode<synchronous>, transform_indices = @transform_1, window_bounds = array<i64: 14, 256>}, {transform_indices = @transform_2, window_bounds = array<i64: 98>}, {transform_indices = @transform_3, window_bounds = array<i64: 2, 4, 256>}]} {
    %c0 = arith.constant 0 : index
    %c0_0 = arith.constant 0 : index
    %c0_1 = arith.constant 0 : index
    %0 = vector.load %arg1[%c0, %c0_0, %c0_1] : memref<2x4x256xf32, #tpu.memory_space<vmem>>, vector<2x4x256xf32>
    %cst = arith.constant dense<0.000000e+00> : vector<2x256xf32>
    %1 = vector.multi_reduction <add>, %0, %cst [1] : vector<2x4x256xf32> to vector<2x256xf32>
    %cst_2 = arith.constant dense<0xFF800000> : vector<2x256xf32>
    %2 = vector.multi_reduction <maximumf>, %0, %cst_2 [1] : vector<2x4x256xf32> to vector<2x256xf32>
    %cst_3 = arith.constant 2.500000e-01 : f32
    %3 = vector.broadcast %cst_3 : f32 to vector<2x256xf32>
    %4 = arith.mulf %1, %3 : vector<2x256xf32>
    %c0_4 = arith.constant 0 : index
    %c0_5 = arith.constant 0 : index
    %5 = vector.load %arg2[%c0_4, %c0_5] : memref<14x256xf32, #tpu.memory_space<vmem>>, vector<1x256xf32>
    %c1 = arith.constant 1 : index
    %c0_6 = arith.constant 0 : index
    %6 = vector.load %arg2[%c1, %c0_6] : memref<14x256xf32, #tpu.memory_space<vmem>>, vector<1x256xf32>
    %c2 = arith.constant 2 : index
    %c0_7 = arith.constant 0 : index
    %7 = vector.load %arg2[%c2, %c0_7] : memref<14x256xf32, #tpu.memory_space<vmem>>, vector<1x256xf32>
    %c3 = arith.constant 3 : index
    %c0_8 = arith.constant 0 : index
    %8 = vector.load %arg2[%c3, %c0_8] : memref<14x256xf32, #tpu.memory_space<vmem>>, vector<1x256xf32>
    %c4 = arith.constant 4 : index
    %c0_9 = arith.constant 0 : index
    %9 = vector.load %arg2[%c4, %c0_9] : memref<14x256xf32, #tpu.memory_space<vmem>>, vector<1x256xf32>
    %c5 = arith.constant 5 : index
    %c0_10 = arith.constant 0 : index
    %10 = vector.load %arg2[%c5, %c0_10] : memref<14x256xf32, #tpu.memory_space<vmem>>, vector<1x256xf32>
    %c6 = arith.constant 6 : index
    %c0_11 = arith.constant 0 : index
    %11 = vector.load %arg2[%c6, %c0_11] : memref<14x256xf32, #tpu.memory_space<vmem>>, vector<1x256xf32>
    %c7 = arith.constant 7 : index
    %c0_12 = arith.constant 0 : index
    %12 = vector.load %arg2[%c7, %c0_12] : memref<14x256xf32, #tpu.memory_space<vmem>>, vector<1x256xf32>
    %c8 = arith.constant 8 : index
    %c0_13 = arith.constant 0 : index
    %13 = vector.load %arg2[%c8, %c0_13] : memref<14x256xf32, #tpu.memory_space<vmem>>, vector<1x256xf32>
    %c9 = arith.constant 9 : index
    %c0_14 = arith.constant 0 : index
    %14 = vector.load %arg2[%c9, %c0_14] : memref<14x256xf32, #tpu.memory_space<vmem>>, vector<1x256xf32>
    %c10 = arith.constant 10 : index
    %c0_15 = arith.constant 0 : index
    %15 = vector.load %arg2[%c10, %c0_15] : memref<14x256xf32, #tpu.memory_space<vmem>>, vector<1x256xf32>
    %c11 = arith.constant 11 : index
    %c0_16 = arith.constant 0 : index
    %16 = vector.load %arg2[%c11, %c0_16] : memref<14x256xf32, #tpu.memory_space<vmem>>, vector<1x256xf32>
    %c12 = arith.constant 12 : index
    %c0_17 = arith.constant 0 : index
    %17 = vector.load %arg2[%c12, %c0_17] : memref<14x256xf32, #tpu.memory_space<vmem>>, vector<1x256xf32>
    %c13 = arith.constant 13 : index
    %c0_18 = arith.constant 0 : index
    %18 = vector.load %arg2[%c13, %c0_18] : memref<14x256xf32, #tpu.memory_space<vmem>>, vector<1x256xf32>
    %c3_i32 = arith.constant 3 : i32
    %19 = tpu.dynamic_rotate %4 by %c3_i32 dim 1 : vector<2x256xf32>, i32 -> vector<2x256xf32>
    %20 = vector.broadcast %5 : vector<1x256xf32> to vector<2x256xf32>
    %21 = arith.mulf %19, %20 : vector<2x256xf32>
    %c2_i32 = arith.constant 2 : i32
    %22 = tpu.dynamic_rotate %4 by %c2_i32 dim 1 : vector<2x256xf32>, i32 -> vector<2x256xf32>
    %23 = vector.broadcast %6 : vector<1x256xf32> to vector<2x256xf32>
    %24 = arith.mulf %22, %23 : vector<2x256xf32>
    %c1_i32 = arith.constant 1 : i32
    %25 = tpu.dynamic_rotate %4 by %c1_i32 dim 1 : vector<2x256xf32>, i32 -> vector<2x256xf32>
    %26 = vector.broadcast %7 : vector<1x256xf32> to vector<2x256xf32>
    %27 = arith.mulf %25, %26 : vector<2x256xf32>
    %28 = vector.broadcast %8 : vector<1x256xf32> to vector<2x256xf32>
    %29 = arith.mulf %4, %28 : vector<2x256xf32>
    %c255_i32 = arith.constant 255 : i32
    %30 = tpu.dynamic_rotate %4 by %c255_i32 dim 1 : vector<2x256xf32>, i32 -> vector<2x256xf32>
    %31 = vector.broadcast %9 : vector<1x256xf32> to vector<2x256xf32>
    %32 = arith.mulf %30, %31 : vector<2x256xf32>
    %c254_i32 = arith.constant 254 : i32
    %33 = tpu.dynamic_rotate %4 by %c254_i32 dim 1 : vector<2x256xf32>, i32 -> vector<2x256xf32>
    %34 = vector.broadcast %10 : vector<1x256xf32> to vector<2x256xf32>
    %35 = arith.mulf %33, %34 : vector<2x256xf32>
    %c253_i32 = arith.constant 253 : i32
    %36 = tpu.dynamic_rotate %4 by %c253_i32 dim 1 : vector<2x256xf32>, i32 -> vector<2x256xf32>
    %37 = vector.broadcast %11 : vector<1x256xf32> to vector<2x256xf32>
    %38 = arith.mulf %36, %37 : vector<2x256xf32>
    %c3_i32_19 = arith.constant 3 : i32
    %39 = tpu.dynamic_rotate %2 by %c3_i32_19 dim 1 : vector<2x256xf32>, i32 -> vector<2x256xf32>
    %40 = vector.broadcast %5 : vector<1x256xf32> to vector<2x256xf32>
    %41 = arith.mulf %39, %40 : vector<2x256xf32>
    %c2_i32_20 = arith.constant 2 : i32
    %42 = tpu.dynamic_rotate %2 by %c2_i32_20 dim 1 : vector<2x256xf32>, i32 -> vector<2x256xf32>
    %43 = vector.broadcast %6 : vector<1x256xf32> to vector<2x256xf32>
    %44 = arith.mulf %42, %43 : vector<2x256xf32>
    %c1_i32_21 = arith.constant 1 : i32
    %45 = tpu.dynamic_rotate %2 by %c1_i32_21 dim 1 : vector<2x256xf32>, i32 -> vector<2x256xf32>
    %46 = vector.broadcast %7 : vector<1x256xf32> to vector<2x256xf32>
    %47 = arith.mulf %45, %46 : vector<2x256xf32>
    %48 = vector.broadcast %8 : vector<1x256xf32> to vector<2x256xf32>
    %49 = arith.mulf %2, %48 : vector<2x256xf32>
    %c255_i32_22 = arith.constant 255 : i32
    %50 = tpu.dynamic_rotate %2 by %c255_i32_22 dim 1 : vector<2x256xf32>, i32 -> vector<2x256xf32>
    %51 = vector.broadcast %9 : vector<1x256xf32> to vector<2x256xf32>
    %52 = arith.mulf %50, %51 : vector<2x256xf32>
    %c254_i32_23 = arith.constant 254 : i32
    %53 = tpu.dynamic_rotate %2 by %c254_i32_23 dim 1 : vector<2x256xf32>, i32 -> vector<2x256xf32>
    %54 = vector.broadcast %10 : vector<1x256xf32> to vector<2x256xf32>
    %55 = arith.mulf %53, %54 : vector<2x256xf32>
    %c253_i32_24 = arith.constant 253 : i32
    %56 = tpu.dynamic_rotate %2 by %c253_i32_24 dim 1 : vector<2x256xf32>, i32 -> vector<2x256xf32>
    %57 = vector.broadcast %11 : vector<1x256xf32> to vector<2x256xf32>
    %58 = arith.mulf %56, %57 : vector<2x256xf32>
    %c0_25 = arith.constant 0 : index
    %59 = memref.load %arg3[%c0_25] : memref<98xf32, #tpu.memory_space<smem>>
    %c49 = arith.constant 49 : index
    %60 = memref.load %arg3[%c49] : memref<98xf32, #tpu.memory_space<smem>>
    %61 = vector.broadcast %59 : f32 to vector<2x256xf32>
    %62 = arith.mulf %21, %61 : vector<2x256xf32>
    %63 = vector.broadcast %60 : f32 to vector<2x256xf32>
    %64 = arith.mulf %41, %63 : vector<2x256xf32>
    %65 = arith.addf %62, %64 : vector<2x256xf32>
    %c1_26 = arith.constant 1 : index
    %66 = memref.load %arg3[%c1_26] : memref<98xf32, #tpu.memory_space<smem>>
    %c50 = arith.constant 50 : index
    %67 = memref.load %arg3[%c50] : memref<98xf32, #tpu.memory_space<smem>>
    %68 = vector.broadcast %66 : f32 to vector<2x256xf32>
    %69 = arith.mulf %24, %68 : vector<2x256xf32>
    %70 = vector.broadcast %67 : f32 to vector<2x256xf32>
    %71 = arith.mulf %44, %70 : vector<2x256xf32>
    %72 = arith.addf %69, %71 : vector<2x256xf32>
    %c2_27 = arith.constant 2 : index
    %73 = memref.load %arg3[%c2_27] : memref<98xf32, #tpu.memory_space<smem>>
    %c51 = arith.constant 51 : index
    %74 = memref.load %arg3[%c51] : memref<98xf32, #tpu.memory_space<smem>>
    %75 = vector.broadcast %73 : f32 to vector<2x256xf32>
    %76 = arith.mulf %27, %75 : vector<2x256xf32>
    %77 = vector.broadcast %74 : f32 to vector<2x256xf32>
    %78 = arith.mulf %47, %77 : vector<2x256xf32>
    %79 = arith.addf %76, %78 : vector<2x256xf32>
    %c3_28 = arith.constant 3 : index
    %80 = memref.load %arg3[%c3_28] : memref<98xf32, #tpu.memory_space<smem>>
    %c52 = arith.constant 52 : index
    %81 = memref.load %arg3[%c52] : memref<98xf32, #tpu.memory_space<smem>>
    %82 = vector.broadcast %80 : f32 to vector<2x256xf32>
    %83 = arith.mulf %29, %82 : vector<2x256xf32>
    %84 = vector.broadcast %81 : f32 to vector<2x256xf32>
    %85 = arith.mulf %49, %84 : vector<2x256xf32>
    %86 = arith.addf %83, %85 : vector<2x256xf32>
    %c4_29 = arith.constant 4 : index
    %87 = memref.load %arg3[%c4_29] : memref<98xf32, #tpu.memory_space<smem>>
    %c53 = arith.constant 53 : index
    %88 = memref.load %arg3[%c53] : memref<98xf32, #tpu.memory_space<smem>>
    %89 = vector.broadcast %87 : f32 to vector<2x256xf32>
    %90 = arith.mulf %32, %89 : vector<2x256xf32>
    %91 = vector.broadcast %88 : f32 to vector<2x256xf32>
    %92 = arith.mulf %52, %91 : vector<2x256xf32>
    %93 = arith.addf %90, %92 : vector<2x256xf32>
    %c5_30 = arith.constant 5 : index
    %94 = memref.load %arg3[%c5_30] : memref<98xf32, #tpu.memory_space<smem>>
    %c54 = arith.constant 54 : index
    %95 = memref.load %arg3[%c54] : memref<98xf32, #tpu.memory_space<smem>>
    %96 = vector.broadcast %94 : f32 to vector<2x256xf32>
    %97 = arith.mulf %35, %96 : vector<2x256xf32>
    %98 = vector.broadcast %95 : f32 to vector<2x256xf32>
    %99 = arith.mulf %55, %98 : vector<2x256xf32>
    %100 = arith.addf %97, %99 : vector<2x256xf32>
    %c6_31 = arith.constant 6 : index
    %101 = memref.load %arg3[%c6_31] : memref<98xf32, #tpu.memory_space<smem>>
    %c55 = arith.constant 55 : index
    %102 = memref.load %arg3[%c55] : memref<98xf32, #tpu.memory_space<smem>>
    %103 = vector.broadcast %101 : f32 to vector<2x256xf32>
    %104 = arith.mulf %38, %103 : vector<2x256xf32>
    %105 = vector.broadcast %102 : f32 to vector<2x256xf32>
    %106 = arith.mulf %58, %105 : vector<2x256xf32>
    %107 = arith.addf %104, %106 : vector<2x256xf32>
    %108 = arith.addf %65, %72 : vector<2x256xf32>
    %109 = arith.addf %79, %86 : vector<2x256xf32>
    %110 = arith.addf %93, %100 : vector<2x256xf32>
    %111 = arith.addf %108, %109 : vector<2x256xf32>
    %112 = arith.addf %110, %107 : vector<2x256xf32>
    %113 = arith.addf %111, %112 : vector<2x256xf32>
    %c48_i32 = arith.constant 48 : i32
    %114 = tpu.dynamic_rotate %113 by %c48_i32 dim 1 : vector<2x256xf32>, i32 -> vector<2x256xf32>
    %115 = vector.broadcast %12 : vector<1x256xf32> to vector<2x256xf32>
    %116 = arith.mulf %114, %115 : vector<2x256xf32>
    %c7_32 = arith.constant 7 : index
    %117 = memref.load %arg3[%c7_32] : memref<98xf32, #tpu.memory_space<smem>>
    %c56 = arith.constant 56 : index
    %118 = memref.load %arg3[%c56] : memref<98xf32, #tpu.memory_space<smem>>
    %119 = vector.broadcast %117 : f32 to vector<2x256xf32>
    %120 = arith.mulf %21, %119 : vector<2x256xf32>
    %121 = vector.broadcast %118 : f32 to vector<2x256xf32>
    %122 = arith.mulf %41, %121 : vector<2x256xf32>
    %123 = arith.addf %120, %122 : vector<2x256xf32>
    %c8_33 = arith.constant 8 : index
    %124 = memref.load %arg3[%c8_33] : memref<98xf32, #tpu.memory_space<smem>>
    %c57 = arith.constant 57 : index
    %125 = memref.load %arg3[%c57] : memref<98xf32, #tpu.memory_space<smem>>
    %126 = vector.broadcast %124 : f32 to vector<2x256xf32>
    %127 = arith.mulf %24, %126 : vector<2x256xf32>
    %128 = vector.broadcast %125 : f32 to vector<2x256xf32>
    %129 = arith.mulf %44, %128 : vector<2x256xf32>
    %130 = arith.addf %127, %129 : vector<2x256xf32>
    %c9_34 = arith.constant 9 : index
    %131 = memref.load %arg3[%c9_34] : memref<98xf32, #tpu.memory_space<smem>>
    %c58 = arith.constant 58 : index
    %132 = memref.load %arg3[%c58] : memref<98xf32, #tpu.memory_space<smem>>
    %133 = vector.broadcast %131 : f32 to vector<2x256xf32>
    %134 = arith.mulf %27, %133 : vector<2x256xf32>
    %135 = vector.broadcast %132 : f32 to vector<2x256xf32>
    %136 = arith.mulf %47, %135 : vector<2x256xf32>
    %137 = arith.addf %134, %136 : vector<2x256xf32>
    %c10_35 = arith.constant 10 : index
    %138 = memref.load %arg3[%c10_35] : memref<98xf32, #tpu.memory_space<smem>>
    %c59 = arith.constant 59 : index
    %139 = memref.load %arg3[%c59] : memref<98xf32, #tpu.memory_space<smem>>
    %140 = vector.broadcast %138 : f32 to vector<2x256xf32>
    %141 = arith.mulf %29, %140 : vector<2x256xf32>
    %142 = vector.broadcast %139 : f32 to vector<2x256xf32>
    %143 = arith.mulf %49, %142 : vector<2x256xf32>
    %144 = arith.addf %141, %143 : vector<2x256xf32>
    %c11_36 = arith.constant 11 : index
    %145 = memref.load %arg3[%c11_36] : memref<98xf32, #tpu.memory_space<smem>>
    %c60 = arith.constant 60 : index
    %146 = memref.load %arg3[%c60] : memref<98xf32, #tpu.memory_space<smem>>
    %147 = vector.broadcast %145 : f32 to vector<2x256xf32>
    %148 = arith.mulf %32, %147 : vector<2x256xf32>
    %149 = vector.broadcast %146 : f32 to vector<2x256xf32>
    %150 = arith.mulf %52, %149 : vector<2x256xf32>
    %151 = arith.addf %148, %150 : vector<2x256xf32>
    %c12_37 = arith.constant 12 : index
    %152 = memref.load %arg3[%c12_37] : memref<98xf32, #tpu.memory_space<smem>>
    %c61 = arith.constant 61 : index
    %153 = memref.load %arg3[%c61] : memref<98xf32, #tpu.memory_space<smem>>
    %154 = vector.broadcast %152 : f32 to vector<2x256xf32>
    %155 = arith.mulf %35, %154 : vector<2x256xf32>
    %156 = vector.broadcast %153 : f32 to vector<2x256xf32>
    %157 = arith.mulf %55, %156 : vector<2x256xf32>
    %158 = arith.addf %155, %157 : vector<2x256xf32>
    %c13_38 = arith.constant 13 : index
    %159 = memref.load %arg3[%c13_38] : memref<98xf32, #tpu.memory_space<smem>>
    %c62 = arith.constant 62 : index
    %160 = memref.load %arg3[%c62] : memref<98xf32, #tpu.memory_space<smem>>
    %161 = vector.broadcast %159 : f32 to vector<2x256xf32>
    %162 = arith.mulf %38, %161 : vector<2x256xf32>
    %163 = vector.broadcast %160 : f32 to vector<2x256xf32>
    %164 = arith.mulf %58, %163 : vector<2x256xf32>
    %165 = arith.addf %162, %164 : vector<2x256xf32>
    %166 = arith.addf %123, %130 : vector<2x256xf32>
    %167 = arith.addf %137, %144 : vector<2x256xf32>
    %168 = arith.addf %151, %158 : vector<2x256xf32>
    %169 = arith.addf %166, %167 : vector<2x256xf32>
    %170 = arith.addf %168, %165 : vector<2x256xf32>
    %171 = arith.addf %169, %170 : vector<2x256xf32>
    %c32_i32 = arith.constant 32 : i32
    %172 = tpu.dynamic_rotate %171 by %c32_i32 dim 1 : vector<2x256xf32>, i32 -> vector<2x256xf32>
    %173 = vector.broadcast %13 : vector<1x256xf32> to vector<2x256xf32>
    %174 = arith.mulf %172, %173 : vector<2x256xf32>
    %c14 = arith.constant 14 : index
    %175 = memref.load %arg3[%c14] : memref<98xf32, #tpu.memory_space<smem>>
    %c63 = arith.constant 63 : index
    %176 = memref.load %arg3[%c63] : memref<98xf32, #tpu.memory_space<smem>>
    %177 = vector.broadcast %175 : f32 to vector<2x256xf32>
    %178 = arith.mulf %21, %177 : vector<2x256xf32>
    %179 = vector.broadcast %176 : f32 to vector<2x256xf32>
    %180 = arith.mulf %41, %179 : vector<2x256xf32>
    %181 = arith.addf %178, %180 : vector<2x256xf32>
    %c15 = arith.constant 15 : index
    %182 = memref.load %arg3[%c15] : memref<98xf32, #tpu.memory_space<smem>>
    %c64 = arith.constant 64 : index
    %183 = memref.load %arg3[%c64] : memref<98xf32, #tpu.memory_space<smem>>
    %184 = vector.broadcast %182 : f32 to vector<2x256xf32>
    %185 = arith.mulf %24, %184 : vector<2x256xf32>
    %186 = vector.broadcast %183 : f32 to vector<2x256xf32>
    %187 = arith.mulf %44, %186 : vector<2x256xf32>
    %188 = arith.addf %185, %187 : vector<2x256xf32>
    %c16 = arith.constant 16 : index
    %189 = memref.load %arg3[%c16] : memref<98xf32, #tpu.memory_space<smem>>
    %c65 = arith.constant 65 : index
    %190 = memref.load %arg3[%c65] : memref<98xf32, #tpu.memory_space<smem>>
    %191 = vector.broadcast %189 : f32 to vector<2x256xf32>
    %192 = arith.mulf %27, %191 : vector<2x256xf32>
    %193 = vector.broadcast %190 : f32 to vector<2x256xf32>
    %194 = arith.mulf %47, %193 : vector<2x256xf32>
    %195 = arith.addf %192, %194 : vector<2x256xf32>
    %c17 = arith.constant 17 : index
    %196 = memref.load %arg3[%c17] : memref<98xf32, #tpu.memory_space<smem>>
    %c66 = arith.constant 66 : index
    %197 = memref.load %arg3[%c66] : memref<98xf32, #tpu.memory_space<smem>>
    %198 = vector.broadcast %196 : f32 to vector<2x256xf32>
    %199 = arith.mulf %29, %198 : vector<2x256xf32>
    %200 = vector.broadcast %197 : f32 to vector<2x256xf32>
    %201 = arith.mulf %49, %200 : vector<2x256xf32>
    %202 = arith.addf %199, %201 : vector<2x256xf32>
    %c18 = arith.constant 18 : index
    %203 = memref.load %arg3[%c18] : memref<98xf32, #tpu.memory_space<smem>>
    %c67 = arith.constant 67 : index
    %204 = memref.load %arg3[%c67] : memref<98xf32, #tpu.memory_space<smem>>
    %205 = vector.broadcast %203 : f32 to vector<2x256xf32>
    %206 = arith.mulf %32, %205 : vector<2x256xf32>
    %207 = vector.broadcast %204 : f32 to vector<2x256xf32>
    %208 = arith.mulf %52, %207 : vector<2x256xf32>
    %209 = arith.addf %206, %208 : vector<2x256xf32>
    %c19 = arith.constant 19 : index
    %210 = memref.load %arg3[%c19] : memref<98xf32, #tpu.memory_space<smem>>
    %c68 = arith.constant 68 : index
    %211 = memref.load %arg3[%c68] : memref<98xf32, #tpu.memory_space<smem>>
    %212 = vector.broadcast %210 : f32 to vector<2x256xf32>
    %213 = arith.mulf %35, %212 : vector<2x256xf32>
    %214 = vector.broadcast %211 : f32 to vector<2x256xf32>
    %215 = arith.mulf %55, %214 : vector<2x256xf32>
    %216 = arith.addf %213, %215 : vector<2x256xf32>
    %c20 = arith.constant 20 : index
    %217 = memref.load %arg3[%c20] : memref<98xf32, #tpu.memory_space<smem>>
    %c69 = arith.constant 69 : index
    %218 = memref.load %arg3[%c69] : memref<98xf32, #tpu.memory_space<smem>>
    %219 = vector.broadcast %217 : f32 to vector<2x256xf32>
    %220 = arith.mulf %38, %219 : vector<2x256xf32>
    %221 = vector.broadcast %218 : f32 to vector<2x256xf32>
    %222 = arith.mulf %58, %221 : vector<2x256xf32>
    %223 = arith.addf %220, %222 : vector<2x256xf32>
    %224 = arith.addf %181, %188 : vector<2x256xf32>
    %225 = arith.addf %195, %202 : vector<2x256xf32>
    %226 = arith.addf %209, %216 : vector<2x256xf32>
    %227 = arith.addf %224, %225 : vector<2x256xf32>
    %228 = arith.addf %226, %223 : vector<2x256xf32>
    %229 = arith.addf %227, %228 : vector<2x256xf32>
    %c16_i32 = arith.constant 16 : i32
    %230 = tpu.dynamic_rotate %229 by %c16_i32 dim 1 : vector<2x256xf32>, i32 -> vector<2x256xf32>
    %231 = vector.broadcast %14 : vector<1x256xf32> to vector<2x256xf32>
    %232 = arith.mulf %230, %231 : vector<2x256xf32>
    %c21 = arith.constant 21 : index
    %233 = memref.load %arg3[%c21] : memref<98xf32, #tpu.memory_space<smem>>
    %c70 = arith.constant 70 : index
    %234 = memref.load %arg3[%c70] : memref<98xf32, #tpu.memory_space<smem>>
    %235 = vector.broadcast %233 : f32 to vector<2x256xf32>
    %236 = arith.mulf %21, %235 : vector<2x256xf32>
    %237 = vector.broadcast %234 : f32 to vector<2x256xf32>
    %238 = arith.mulf %41, %237 : vector<2x256xf32>
    %239 = arith.addf %236, %238 : vector<2x256xf32>
    %c22 = arith.constant 22 : index
    %240 = memref.load %arg3[%c22] : memref<98xf32, #tpu.memory_space<smem>>
    %c71 = arith.constant 71 : index
    %241 = memref.load %arg3[%c71] : memref<98xf32, #tpu.memory_space<smem>>
    %242 = vector.broadcast %240 : f32 to vector<2x256xf32>
    %243 = arith.mulf %24, %242 : vector<2x256xf32>
    %244 = vector.broadcast %241 : f32 to vector<2x256xf32>
    %245 = arith.mulf %44, %244 : vector<2x256xf32>
    %246 = arith.addf %243, %245 : vector<2x256xf32>
    %c23 = arith.constant 23 : index
    %247 = memref.load %arg3[%c23] : memref<98xf32, #tpu.memory_space<smem>>
    %c72 = arith.constant 72 : index
    %248 = memref.load %arg3[%c72] : memref<98xf32, #tpu.memory_space<smem>>
    %249 = vector.broadcast %247 : f32 to vector<2x256xf32>
    %250 = arith.mulf %27, %249 : vector<2x256xf32>
    %251 = vector.broadcast %248 : f32 to vector<2x256xf32>
    %252 = arith.mulf %47, %251 : vector<2x256xf32>
    %253 = arith.addf %250, %252 : vector<2x256xf32>
    %c24 = arith.constant 24 : index
    %254 = memref.load %arg3[%c24] : memref<98xf32, #tpu.memory_space<smem>>
    %c73 = arith.constant 73 : index
    %255 = memref.load %arg3[%c73] : memref<98xf32, #tpu.memory_space<smem>>
    %256 = vector.broadcast %254 : f32 to vector<2x256xf32>
    %257 = arith.mulf %29, %256 : vector<2x256xf32>
    %258 = vector.broadcast %255 : f32 to vector<2x256xf32>
    %259 = arith.mulf %49, %258 : vector<2x256xf32>
    %260 = arith.addf %257, %259 : vector<2x256xf32>
    %c25 = arith.constant 25 : index
    %261 = memref.load %arg3[%c25] : memref<98xf32, #tpu.memory_space<smem>>
    %c74 = arith.constant 74 : index
    %262 = memref.load %arg3[%c74] : memref<98xf32, #tpu.memory_space<smem>>
    %263 = vector.broadcast %261 : f32 to vector<2x256xf32>
    %264 = arith.mulf %32, %263 : vector<2x256xf32>
    %265 = vector.broadcast %262 : f32 to vector<2x256xf32>
    %266 = arith.mulf %52, %265 : vector<2x256xf32>
    %267 = arith.addf %264, %266 : vector<2x256xf32>
    %c26 = arith.constant 26 : index
    %268 = memref.load %arg3[%c26] : memref<98xf32, #tpu.memory_space<smem>>
    %c75 = arith.constant 75 : index
    %269 = memref.load %arg3[%c75] : memref<98xf32, #tpu.memory_space<smem>>
    %270 = vector.broadcast %268 : f32 to vector<2x256xf32>
    %271 = arith.mulf %35, %270 : vector<2x256xf32>
    %272 = vector.broadcast %269 : f32 to vector<2x256xf32>
    %273 = arith.mulf %55, %272 : vector<2x256xf32>
    %274 = arith.addf %271, %273 : vector<2x256xf32>
    %c27 = arith.constant 27 : index
    %275 = memref.load %arg3[%c27] : memref<98xf32, #tpu.memory_space<smem>>
    %c76 = arith.constant 76 : index
    %276 = memref.load %arg3[%c76] : memref<98xf32, #tpu.memory_space<smem>>
    %277 = vector.broadcast %275 : f32 to vector<2x256xf32>
    %278 = arith.mulf %38, %277 : vector<2x256xf32>
    %279 = vector.broadcast %276 : f32 to vector<2x256xf32>
    %280 = arith.mulf %58, %279 : vector<2x256xf32>
    %281 = arith.addf %278, %280 : vector<2x256xf32>
    %282 = arith.addf %239, %246 : vector<2x256xf32>
    %283 = arith.addf %253, %260 : vector<2x256xf32>
    %284 = arith.addf %267, %274 : vector<2x256xf32>
    %285 = arith.addf %282, %283 : vector<2x256xf32>
    %286 = arith.addf %284, %281 : vector<2x256xf32>
    %287 = arith.addf %285, %286 : vector<2x256xf32>
    %288 = vector.broadcast %15 : vector<1x256xf32> to vector<2x256xf32>
    %289 = arith.mulf %287, %288 : vector<2x256xf32>
    %c28 = arith.constant 28 : index
    %290 = memref.load %arg3[%c28] : memref<98xf32, #tpu.memory_space<smem>>
    %c77 = arith.constant 77 : index
    %291 = memref.load %arg3[%c77] : memref<98xf32, #tpu.memory_space<smem>>
    %292 = vector.broadcast %290 : f32 to vector<2x256xf32>
    %293 = arith.mulf %21, %292 : vector<2x256xf32>
    %294 = vector.broadcast %291 : f32 to vector<2x256xf32>
    %295 = arith.mulf %41, %294 : vector<2x256xf32>
    %296 = arith.addf %293, %295 : vector<2x256xf32>
    %c29 = arith.constant 29 : index
    %297 = memref.load %arg3[%c29] : memref<98xf32, #tpu.memory_space<smem>>
    %c78 = arith.constant 78 : index
    %298 = memref.load %arg3[%c78] : memref<98xf32, #tpu.memory_space<smem>>
    %299 = vector.broadcast %297 : f32 to vector<2x256xf32>
    %300 = arith.mulf %24, %299 : vector<2x256xf32>
    %301 = vector.broadcast %298 : f32 to vector<2x256xf32>
    %302 = arith.mulf %44, %301 : vector<2x256xf32>
    %303 = arith.addf %300, %302 : vector<2x256xf32>
    %c30 = arith.constant 30 : index
    %304 = memref.load %arg3[%c30] : memref<98xf32, #tpu.memory_space<smem>>
    %c79 = arith.constant 79 : index
    %305 = memref.load %arg3[%c79] : memref<98xf32, #tpu.memory_space<smem>>
    %306 = vector.broadcast %304 : f32 to vector<2x256xf32>
    %307 = arith.mulf %27, %306 : vector<2x256xf32>
    %308 = vector.broadcast %305 : f32 to vector<2x256xf32>
    %309 = arith.mulf %47, %308 : vector<2x256xf32>
    %310 = arith.addf %307, %309 : vector<2x256xf32>
    %c31 = arith.constant 31 : index
    %311 = memref.load %arg3[%c31] : memref<98xf32, #tpu.memory_space<smem>>
    %c80 = arith.constant 80 : index
    %312 = memref.load %arg3[%c80] : memref<98xf32, #tpu.memory_space<smem>>
    %313 = vector.broadcast %311 : f32 to vector<2x256xf32>
    %314 = arith.mulf %29, %313 : vector<2x256xf32>
    %315 = vector.broadcast %312 : f32 to vector<2x256xf32>
    %316 = arith.mulf %49, %315 : vector<2x256xf32>
    %317 = arith.addf %314, %316 : vector<2x256xf32>
    %c32 = arith.constant 32 : index
    %318 = memref.load %arg3[%c32] : memref<98xf32, #tpu.memory_space<smem>>
    %c81 = arith.constant 81 : index
    %319 = memref.load %arg3[%c81] : memref<98xf32, #tpu.memory_space<smem>>
    %320 = vector.broadcast %318 : f32 to vector<2x256xf32>
    %321 = arith.mulf %32, %320 : vector<2x256xf32>
    %322 = vector.broadcast %319 : f32 to vector<2x256xf32>
    %323 = arith.mulf %52, %322 : vector<2x256xf32>
    %324 = arith.addf %321, %323 : vector<2x256xf32>
    %c33 = arith.constant 33 : index
    %325 = memref.load %arg3[%c33] : memref<98xf32, #tpu.memory_space<smem>>
    %c82 = arith.constant 82 : index
    %326 = memref.load %arg3[%c82] : memref<98xf32, #tpu.memory_space<smem>>
    %327 = vector.broadcast %325 : f32 to vector<2x256xf32>
    %328 = arith.mulf %35, %327 : vector<2x256xf32>
    %329 = vector.broadcast %326 : f32 to vector<2x256xf32>
    %330 = arith.mulf %55, %329 : vector<2x256xf32>
    %331 = arith.addf %328, %330 : vector<2x256xf32>
    %c34 = arith.constant 34 : index
    %332 = memref.load %arg3[%c34] : memref<98xf32, #tpu.memory_space<smem>>
    %c83 = arith.constant 83 : index
    %333 = memref.load %arg3[%c83] : memref<98xf32, #tpu.memory_space<smem>>
    %334 = vector.broadcast %332 : f32 to vector<2x256xf32>
    %335 = arith.mulf %38, %334 : vector<2x256xf32>
    %336 = vector.broadcast %333 : f32 to vector<2x256xf32>
    %337 = arith.mulf %58, %336 : vector<2x256xf32>
    %338 = arith.addf %335, %337 : vector<2x256xf32>
    %339 = arith.addf %296, %303 : vector<2x256xf32>
    %340 = arith.addf %310, %317 : vector<2x256xf32>
    %341 = arith.addf %324, %331 : vector<2x256xf32>
    %342 = arith.addf %339, %340 : vector<2x256xf32>
    %343 = arith.addf %341, %338 : vector<2x256xf32>
    %344 = arith.addf %342, %343 : vector<2x256xf32>
    %c240_i32 = arith.constant 240 : i32
    %345 = tpu.dynamic_rotate %344 by %c240_i32 dim 1 : vector<2x256xf32>, i32 -> vector<2x256xf32>
    %346 = vector.broadcast %16 : vector<1x256xf32> to vector<2x256xf32>
    %347 = arith.mulf %345, %346 : vector<2x256xf32>
    %c35 = arith.constant 35 : index
    %348 = memref.load %arg3[%c35] : memref<98xf32, #tpu.memory_space<smem>>
    %c84 = arith.constant 84 : index
    %349 = memref.load %arg3[%c84] : memref<98xf32, #tpu.memory_space<smem>>
    %350 = vector.broadcast %348 : f32 to vector<2x256xf32>
    %351 = arith.mulf %21, %350 : vector<2x256xf32>
    %352 = vector.broadcast %349 : f32 to vector<2x256xf32>
    %353 = arith.mulf %41, %352 : vector<2x256xf32>
    %354 = arith.addf %351, %353 : vector<2x256xf32>
    %c36 = arith.constant 36 : index
    %355 = memref.load %arg3[%c36] : memref<98xf32, #tpu.memory_space<smem>>
    %c85 = arith.constant 85 : index
    %356 = memref.load %arg3[%c85] : memref<98xf32, #tpu.memory_space<smem>>
    %357 = vector.broadcast %355 : f32 to vector<2x256xf32>
    %358 = arith.mulf %24, %357 : vector<2x256xf32>
    %359 = vector.broadcast %356 : f32 to vector<2x256xf32>
    %360 = arith.mulf %44, %359 : vector<2x256xf32>
    %361 = arith.addf %358, %360 : vector<2x256xf32>
    %c37 = arith.constant 37 : index
    %362 = memref.load %arg3[%c37] : memref<98xf32, #tpu.memory_space<smem>>
    %c86 = arith.constant 86 : index
    %363 = memref.load %arg3[%c86] : memref<98xf32, #tpu.memory_space<smem>>
    %364 = vector.broadcast %362 : f32 to vector<2x256xf32>
    %365 = arith.mulf %27, %364 : vector<2x256xf32>
    %366 = vector.broadcast %363 : f32 to vector<2x256xf32>
    %367 = arith.mulf %47, %366 : vector<2x256xf32>
    %368 = arith.addf %365, %367 : vector<2x256xf32>
    %c38 = arith.constant 38 : index
    %369 = memref.load %arg3[%c38] : memref<98xf32, #tpu.memory_space<smem>>
    %c87 = arith.constant 87 : index
    %370 = memref.load %arg3[%c87] : memref<98xf32, #tpu.memory_space<smem>>
    %371 = vector.broadcast %369 : f32 to vector<2x256xf32>
    %372 = arith.mulf %29, %371 : vector<2x256xf32>
    %373 = vector.broadcast %370 : f32 to vector<2x256xf32>
    %374 = arith.mulf %49, %373 : vector<2x256xf32>
    %375 = arith.addf %372, %374 : vector<2x256xf32>
    %c39 = arith.constant 39 : index
    %376 = memref.load %arg3[%c39] : memref<98xf32, #tpu.memory_space<smem>>
    %c88 = arith.constant 88 : index
    %377 = memref.load %arg3[%c88] : memref<98xf32, #tpu.memory_space<smem>>
    %378 = vector.broadcast %376 : f32 to vector<2x256xf32>
    %379 = arith.mulf %32, %378 : vector<2x256xf32>
    %380 = vector.broadcast %377 : f32 to vector<2x256xf32>
    %381 = arith.mulf %52, %380 : vector<2x256xf32>
    %382 = arith.addf %379, %381 : vector<2x256xf32>
    %c40 = arith.constant 40 : index
    %383 = memref.load %arg3[%c40] : memref<98xf32, #tpu.memory_space<smem>>
    %c89 = arith.constant 89 : index
    %384 = memref.load %arg3[%c89] : memref<98xf32, #tpu.memory_space<smem>>
    %385 = vector.broadcast %383 : f32 to vector<2x256xf32>
    %386 = arith.mulf %35, %385 : vector<2x256xf32>
    %387 = vector.broadcast %384 : f32 to vector<2x256xf32>
    %388 = arith.mulf %55, %387 : vector<2x256xf32>
    %389 = arith.addf %386, %388 : vector<2x256xf32>
    %c41 = arith.constant 41 : index
    %390 = memref.load %arg3[%c41] : memref<98xf32, #tpu.memory_space<smem>>
    %c90 = arith.constant 90 : index
    %391 = memref.load %arg3[%c90] : memref<98xf32, #tpu.memory_space<smem>>
    %392 = vector.broadcast %390 : f32 to vector<2x256xf32>
    %393 = arith.mulf %38, %392 : vector<2x256xf32>
    %394 = vector.broadcast %391 : f32 to vector<2x256xf32>
    %395 = arith.mulf %58, %394 : vector<2x256xf32>
    %396 = arith.addf %393, %395 : vector<2x256xf32>
    %397 = arith.addf %354, %361 : vector<2x256xf32>
    %398 = arith.addf %368, %375 : vector<2x256xf32>
    %399 = arith.addf %382, %389 : vector<2x256xf32>
    %400 = arith.addf %397, %398 : vector<2x256xf32>
    %401 = arith.addf %399, %396 : vector<2x256xf32>
    %402 = arith.addf %400, %401 : vector<2x256xf32>
    %c224_i32 = arith.constant 224 : i32
    %403 = tpu.dynamic_rotate %402 by %c224_i32 dim 1 : vector<2x256xf32>, i32 -> vector<2x256xf32>
    %404 = vector.broadcast %17 : vector<1x256xf32> to vector<2x256xf32>
    %405 = arith.mulf %403, %404 : vector<2x256xf32>
    %c42 = arith.constant 42 : index
    %406 = memref.load %arg3[%c42] : memref<98xf32, #tpu.memory_space<smem>>
    %c91 = arith.constant 91 : index
    %407 = memref.load %arg3[%c91] : memref<98xf32, #tpu.memory_space<smem>>
    %408 = vector.broadcast %406 : f32 to vector<2x256xf32>
    %409 = arith.mulf %21, %408 : vector<2x256xf32>
    %410 = vector.broadcast %407 : f32 to vector<2x256xf32>
    %411 = arith.mulf %41, %410 : vector<2x256xf32>
    %412 = arith.addf %409, %411 : vector<2x256xf32>
    %c43 = arith.constant 43 : index
    %413 = memref.load %arg3[%c43] : memref<98xf32, #tpu.memory_space<smem>>
    %c92 = arith.constant 92 : index
    %414 = memref.load %arg3[%c92] : memref<98xf32, #tpu.memory_space<smem>>
    %415 = vector.broadcast %413 : f32 to vector<2x256xf32>
    %416 = arith.mulf %24, %415 : vector<2x256xf32>
    %417 = vector.broadcast %414 : f32 to vector<2x256xf32>
    %418 = arith.mulf %44, %417 : vector<2x256xf32>
    %419 = arith.addf %416, %418 : vector<2x256xf32>
    %c44 = arith.constant 44 : index
    %420 = memref.load %arg3[%c44] : memref<98xf32, #tpu.memory_space<smem>>
    %c93 = arith.constant 93 : index
    %421 = memref.load %arg3[%c93] : memref<98xf32, #tpu.memory_space<smem>>
    %422 = vector.broadcast %420 : f32 to vector<2x256xf32>
    %423 = arith.mulf %27, %422 : vector<2x256xf32>
    %424 = vector.broadcast %421 : f32 to vector<2x256xf32>
    %425 = arith.mulf %47, %424 : vector<2x256xf32>
    %426 = arith.addf %423, %425 : vector<2x256xf32>
    %c45 = arith.constant 45 : index
    %427 = memref.load %arg3[%c45] : memref<98xf32, #tpu.memory_space<smem>>
    %c94 = arith.constant 94 : index
    %428 = memref.load %arg3[%c94] : memref<98xf32, #tpu.memory_space<smem>>
    %429 = vector.broadcast %427 : f32 to vector<2x256xf32>
    %430 = arith.mulf %29, %429 : vector<2x256xf32>
    %431 = vector.broadcast %428 : f32 to vector<2x256xf32>
    %432 = arith.mulf %49, %431 : vector<2x256xf32>
    %433 = arith.addf %430, %432 : vector<2x256xf32>
    %c46 = arith.constant 46 : index
    %434 = memref.load %arg3[%c46] : memref<98xf32, #tpu.memory_space<smem>>
    %c95 = arith.constant 95 : index
    %435 = memref.load %arg3[%c95] : memref<98xf32, #tpu.memory_space<smem>>
    %436 = vector.broadcast %434 : f32 to vector<2x256xf32>
    %437 = arith.mulf %32, %436 : vector<2x256xf32>
    %438 = vector.broadcast %435 : f32 to vector<2x256xf32>
    %439 = arith.mulf %52, %438 : vector<2x256xf32>
    %440 = arith.addf %437, %439 : vector<2x256xf32>
    %c47 = arith.constant 47 : index
    %441 = memref.load %arg3[%c47] : memref<98xf32, #tpu.memory_space<smem>>
    %c96 = arith.constant 96 : index
    %442 = memref.load %arg3[%c96] : memref<98xf32, #tpu.memory_space<smem>>
    %443 = vector.broadcast %441 : f32 to vector<2x256xf32>
    %444 = arith.mulf %35, %443 : vector<2x256xf32>
    %445 = vector.broadcast %442 : f32 to vector<2x256xf32>
    %446 = arith.mulf %55, %445 : vector<2x256xf32>
    %447 = arith.addf %444, %446 : vector<2x256xf32>
    %c48 = arith.constant 48 : index
    %448 = memref.load %arg3[%c48] : memref<98xf32, #tpu.memory_space<smem>>
    %c97 = arith.constant 97 : index
    %449 = memref.load %arg3[%c97] : memref<98xf32, #tpu.memory_space<smem>>
    %450 = vector.broadcast %448 : f32 to vector<2x256xf32>
    %451 = arith.mulf %38, %450 : vector<2x256xf32>
    %452 = vector.broadcast %449 : f32 to vector<2x256xf32>
    %453 = arith.mulf %58, %452 : vector<2x256xf32>
    %454 = arith.addf %451, %453 : vector<2x256xf32>
    %455 = arith.addf %412, %419 : vector<2x256xf32>
    %456 = arith.addf %426, %433 : vector<2x256xf32>
    %457 = arith.addf %440, %447 : vector<2x256xf32>
    %458 = arith.addf %455, %456 : vector<2x256xf32>
    %459 = arith.addf %457, %454 : vector<2x256xf32>
    %460 = arith.addf %458, %459 : vector<2x256xf32>
    %c208_i32 = arith.constant 208 : i32
    %461 = tpu.dynamic_rotate %460 by %c208_i32 dim 1 : vector<2x256xf32>, i32 -> vector<2x256xf32>
    %462 = vector.broadcast %18 : vector<1x256xf32> to vector<2x256xf32>
    %463 = arith.mulf %461, %462 : vector<2x256xf32>
    %464 = arith.addf %116, %174 : vector<2x256xf32>
    %465 = arith.addf %232, %289 : vector<2x256xf32>
    %466 = arith.addf %347, %405 : vector<2x256xf32>
    %467 = arith.addf %464, %465 : vector<2x256xf32>
    %468 = arith.addf %466, %463 : vector<2x256xf32>
    %469 = arith.addf %467, %468 : vector<2x256xf32>
    %470 = arith.negf %469 : vector<2x256xf32>
    %471 = math.exp %470 : vector<2x256xf32>
    %cst_39 = arith.constant 1.000000e+00 : f32
    %472 = vector.broadcast %cst_39 : f32 to vector<2x256xf32>
    %473 = arith.addf %472, %471 : vector<2x256xf32>
    %474 = arith.divf %472, %473 : vector<2x256xf32>
    %475 = vector.shape_cast %474 : vector<2x256xf32> to vector<2x1x256xf32>
    %c0_40 = arith.constant 0 : index
    %c0_41 = arith.constant 0 : index
    %c0_42 = arith.constant 0 : index
    %476 = vector.load %arg1[%c0_40, %c0_41, %c0_42] : memref<2x4x256xf32, #tpu.memory_space<vmem>>, vector<2x4x256xf32>
    %477 = vector.broadcast %475 : vector<2x1x256xf32> to vector<2x4x256xf32>
    %478 = arith.mulf %477, %476 : vector<2x4x256xf32>
    %c0_43 = arith.constant 0 : index
    %c0_44 = arith.constant 0 : index
    %c0_45 = arith.constant 0 : index
    %479 = vector.load %arg4[%c0_43, %c0_44, %c0_45] : memref<2x4x256xf32, #tpu.memory_space<vmem>>, vector<2x4x256xf32>
    tpu.vector_store %arg4[%c0_43, %c0_44, %c0_45], %478 {strides = array<i32>} : memref<2x4x256xf32, #tpu.memory_space<vmem>>, vector<2x4x256xf32>,
    return
  }
  func.func @transform_0(%arg0: i32) -> (i32, i32, i32) {
    %c0_i32 = arith.constant 0 : i32
    %c0_i32_0 = arith.constant 0 : i32
    %c0_i32_1 = arith.constant 0 : i32
    return %arg0, %c0_i32, %c0_i32_0 : i32, i32, i32
  }
  func.func @transform_1(%arg0: i32) -> (i32, i32) {
    %c0_i32 = arith.constant 0 : i32
    %c0_i32_0 = arith.constant 0 : i32
    %c0_i32_1 = arith.constant 0 : i32
    return %c0_i32, %c0_i32_0 : i32, i32
  }
  func.func @transform_2(%arg0: i32) -> i32 {
    %c0_i32 = arith.constant 0 : i32
    %c0_i32_0 = arith.constant 0 : i32
    return %c0_i32 : i32
  }
  func.func @transform_3(%arg0: i32) -> (i32, i32, i32) {
    %c0_i32 = arith.constant 0 : i32
    %c0_i32_0 = arith.constant 0 : i32
    %c0_i32_1 = arith.constant 0 : i32
    return %arg0, %c0_i32, %c0_i32_0 : i32, i32, i32
  }
}

</mosaic_0001>

<llo_original>
// kernel: tpu_custom_call.1
$region0: #{tpu_custom_call.1}
  #allocation0 [shape = 'u32[]', space=smem, size = 0x4, offset = 0x4, fixed_abs, tag = 'smem constant byte address 0x4 - core index']
  #allocation1 [shape = 'u32[72,128]{1,0:T(1,128)}', space=vmem, size = 0x9000, scoped, tag = 'internal scratch']
  %s0 = inlined_call_operand.hbm [shape: f32[2,4,256], index: 0, kind: input, shape index: {}]
  %s1 = inlined_call_operand.hbm [shape: f32[14,256], index: 1, kind: input, shape index: {}]
  %s2 = inlined_call_operand.vmem [shape: f32[98], index: 2, kind: input, shape index: {}]
  %s3 = inlined_call_operand.hbm [shape: f32[2,4,256], index: 3, kind: output, shape index: {}]
  %s4 = sld [smem:[#allocation0]]
  $region34: #{tpu_custom_call.1} parent=0
    _
  %s6 = ssub.s32 1, %s4
  %s7 = scalar_select 0, %s6, %s4
  $region1: #{tpu_custom_call.1} parent=0
    #allocation2 [shape = 'u8[8192]{0}', space=vmem, size = 0x2000, scoped, tag = 'input window, operand 0, single buffered']
    #allocation3 [shape = 's32[1]{0}', space=sflag, size = 0x4, scoped, tag = 'scoped memory for tpu_custom_call.1']
    #allocation4 [shape = 's32[1]{0}', space=sflag, size = 0x4, scoped, tag = 'scoped memory for tpu_custom_call.1']
    #allocation5 [shape = 's32[1]{0}', space=sflag, size = 0x4, scoped, tag = 'scoped memory for tpu_custom_call.1']
    #allocation6 [shape = 'u8[16384]{0}', space=vmem, size = 0x4000, scoped, tag = 'input window, operand 1, single buffered']
    #allocation7 [shape = 's32[1]{0}', space=sflag, size = 0x4, scoped, tag = 'scoped memory for tpu_custom_call.1']
    #allocation8 [shape = 'u8[512]{0}', space=smem, size = 0x200, scoped, tag = 'input window, operand 2, single buffered']
    #allocation9 [shape = 'u8[8192]{0}', space=vmem, size = 0x2000, scoped, tag = 'output window, operand 0, single buffered']
    %8 = vsyncpa [#allocation3], 0
    %9 = vsyncpa [#allocation7], 0
    %10 = vsyncpa [#allocation5], 0
    %11 = vsyncpa [#allocation4], 0
    // Predicated region
    $region2: #{tpu_custom_call.1} parent=1 // pred_check
      _
    $region3: #{tpu_custom_call.1} parent=1 // pred_check_branch
      %13 = sbr.rel (0) target = $region5
    $region4: #{tpu_custom_call.1} parent=1 // pred_region
      %15 = vsyncadd [#allocation3], 0
      %s16 = sshll.u32 %s0, 4
      %s17 = int_to_ptr.hbm [resolvable:$true] %s16
      %s18 = sshll.u32 [#allocation2], 4
      %s19 = int_to_ptr.vmem [resolvable:$true] %s18
      %24 = dma.hbm_to_vmem [thread:$0]  %s17, 256, %s19, [#allocation3], 128, 128, 8
    $region5: #{tpu_custom_call.1} parent=1 // pred_fallthru
      _
    // Predicated region
    $region6: #{tpu_custom_call.1} parent=1 // pred_check
      _
    $region7: #{tpu_custom_call.1} parent=1 // pred_check_branch
      %26 = sbr.rel (0) target = $region9
    $region8: #{tpu_custom_call.1} parent=1 // pred_region
      %28 = vsyncadd [#allocation7], 0
      %s29 = sshll.u32 %s1, 4
      %s30 = int_to_ptr.hbm [resolvable:$true] %s29
      %s31 = sshll.u32 [#allocation6], 4
      %s32 = int_to_ptr.vmem [resolvable:$true] %s31
      %37 = dma.hbm_to_vmem [thread:$0]  %s30, 512, %s32, [#allocation7], 256, 256, 16
    $region9: #{tpu_custom_call.1} parent=1 // pred_fallthru
      _
    // Predicated region
    $region10: #{tpu_custom_call.1} parent=1 // pred_check
      _
    $region11: #{tpu_custom_call.1} parent=1 // pred_check_branch
      %39 = sbr.rel (0) target = $region13
    $region12: #{tpu_custom_call.1} parent=1 // pred_region
      %41 = vsyncadd [#allocation5], 0
      %s43 = sshll.u32 %s2, 4
      %s44 = int_to_ptr.vmem [resolvable:$true] %s43
      %46 = dma.vmem_to_smem %s44, 16, [#allocation8], [#allocation5]
    $region13: #{tpu_custom_call.1} parent=1 // pred_fallthru
      _
    // Predicated region
    $region14: #{tpu_custom_call.1} parent=1 // pred_check
      _
    $region15: #{tpu_custom_call.1} parent=1 // pred_check_branch
      %48 = sbr.rel (0) target = $region17
    $region16: #{tpu_custom_call.1} parent=1 // pred_region
      %50 = dma.done [#allocation3], 256
    $region17: #{tpu_custom_call.1} parent=1 // pred_fallthru
      _
    // Predicated region
    $region18: #{tpu_custom_call.1} parent=1 // pred_check
      _
    $region19: #{tpu_custom_call.1} parent=1 // pred_check_branch
      %52 = sbr.rel (0) target = $region21
    $region20: #{tpu_custom_call.1} parent=1 // pred_region
      %54 = dma.done [#allocation7], 512
    $region21: #{tpu_custom_call.1} parent=1 // pred_fallthru
      _
    // Predicated region
    $region22: #{tpu_custom_call.1} parent=1 // pred_check
      _
    $region23: #{tpu_custom_call.1} parent=1 // pred_check_branch
      %56 = sbr.rel (0) target = $region25
    $region24: #{tpu_custom_call.1} parent=1 // pred_region
      %58 = dma.done [#allocation5], 16
    $region25: #{tpu_custom_call.1} parent=1 // pred_fallthru
      _
    %59 = sfence
    %v60 = vld [vmem:[#allocation2] sm:$0xff]
    %v61 = vld [vmem:[#allocation2 + $0x8] sm:$0xff]
    %64 = vst [vmem:[#allocation1] ss:$2 sm:$0xff] %v60
    %v65 = vld.sshfl [vmem:[#allocation1] sm:$0xff pattern:$0x75316420]
    %v66 = vld.sshfl [vmem:[#allocation1 + $0x8] sm:$0xff pattern:$0x75316420]
    %s67 = scalar_lea.vmem [#allocation1], 16
    %68 = vst [vmem:[%s67] ss:$2 sm:$0xff] %v61
    %v69 = vld.sshfl [vmem:[#allocation1 + $0x10] sm:$0xff pattern:$0x75316420]
    %v70 = vld.sshfl [vmem:[#allocation1 + $0x18] sm:$0xff pattern:$0x75316420]
    %vm75 = vcmask 1043456
    %v76 = vsel %vm75, %v65, 0.0
    %v77 = vrot.slane %v76, 4
    %v78 = vadd.f32 %v76, %v77
    %v79 = vrot.slane %v78, 2
    %v80 = vadd.f32 %v78, %v79
    %v81 = vrot.slane %v80, 1
    %v82 = vadd.f32 %v80, %v81
    %v83 = vsel %vm75, %v66, 0.0
    %v84 = vrot.slane %v83, 4
    %v85 = vadd.f32 %v83, %v84
    %v86 = vrot.slane %v85, 2
    %v87 = vadd.f32 %v85, %v86
    %v88 = vrot.slane %v87, 1
    %v89 = vadd.f32 %v87, %v88
    %v90 = vsel %vm75, %v69, 0.0
    %v91 = vrot.slane %v90, 4
    %v92 = vadd.f32 %v90, %v91
    %v93 = vrot.slane %v92, 2
    %v94 = vadd.f32 %v92, %v93
    %v95 = vrot.slane %v94, 1
    %v96 = vadd.f32 %v94, %v95
    %v97 = vsel %vm75, %v70, 0.0
    %v98 = vrot.slane %v97, 4
    %v99 = vadd.f32 %v97, %v98
    %v100 = vrot.slane %v99, 2
    %v101 = vadd.f32 %v99, %v100
    %v102 = vrot.slane %v101, 1
    %v103 = vadd.f32 %v101, %v102
    %104 = vst [vmem:[#allocation1] ss:$2 sm:$0xff] %v60
    %v105 = vld.sshfl [vmem:[#allocation1] sm:$0xff pattern:$0x75316420]
    %v106 = vld.sshfl [vmem:[#allocation1 + $0x8] sm:$0xff pattern:$0x75316420]
    %s107 = scalar_lea.vmem [#allocation1], 16
    %108 = vst [vmem:[%s107] ss:$2 sm:$0xff] %v61
    %v109 = vld.sshfl [vmem:[#allocation1 + $0x10] sm:$0xff pattern:$0x75316420]
    %v110 = vld.sshfl [vmem:[#allocation1 + $0x18] sm:$0xff pattern:$0x75316420]
    %v115 = vsel %vm75, %v105, -inf
    %v116 = vrot.slane %v115, 4
    %v117 = vmax.f32 %v115, %v116
    %v118 = vrot.slane %v117, 2
    %v119 = vmax.f32 %v117, %v118
    %v120 = vrot.slane %v119, 1
    %v121 = vmax.f32 %v119, %v120
    %v122 = vsel %vm75, %v106, -inf
    %v123 = vrot.slane %v122, 4
    %v124 = vmax.f32 %v122, %v123
    %v125 = vrot.slane %v124, 2
    %v126 = vmax.f32 %v124, %v125
    %v127 = vrot.slane %v126, 1
    %v128 = vmax.f32 %v126, %v127
    %v129 = vsel %vm75, %v109, -inf
    %v130 = vrot.slane %v129, 4
    %v131 = vmax.f32 %v129, %v130
    %v132 = vrot.slane %v131, 2
    %v133 = vmax.f32 %v131, %v132
    %v134 = vrot.slane %v133, 1
    %v135 = vmax.f32 %v133, %v134
    %v136 = vsel %vm75, %v110, -inf
    %v137 = vrot.slane %v136, 4
    %v138 = vmax.f32 %v136, %v137
    %v139 = vrot.slane %v138, 2
    %v140 = vmax.f32 %v138, %v139
    %v141 = vrot.slane %v140, 1
    %v142 = vmax.f32 %v140, %v141
    %v143 = vmul.f32 %v82, 0.25
    %v144 = vmul.f32 %v89, 0.25
    %v145 = vmul.f32 %v96, 0.25
    %v146 = vmul.f32 %v103, 0.25
    %v147 = vld [vmem:[#allocation6] ss:$8 sm:$0x3]
    %s148 = scalar_lea.vmem [#allocation6], 1
    %v149 = vld [vmem:[%s148] ss:$8 sm:$0x3]
    %s150 = scalar_lea.vmem [#allocation6], 2
    %v151 = vld [vmem:[%s150] ss:$8 sm:$0x3]
    %s152 = scalar_lea.vmem [#allocation6], 3
    %v153 = vld [vmem:[%s152] ss:$8 sm:$0x3]
    %s154 = scalar_lea.vmem [#allocation6], 4
    %v155 = vld [vmem:[%s154] ss:$8 sm:$0x3]
    %s156 = scalar_lea.vmem [#allocation6], 5
    %v157 = vld [vmem:[%s156] ss:$8 sm:$0x3]
    %s158 = scalar_lea.vmem [#allocation6], 6
    %v159 = vld [vmem:[%s158] ss:$8 sm:$0x3]
    %s160 = scalar_lea.vmem [#allocation6], 7
    %v161 = vld [vmem:[%s160] ss:$8 sm:$0x3]
    %s162 = scalar_lea.vmem [#allocation6], 16
    %v163 = vld [vmem:[%s162] ss:$8 sm:$0x3]
    %s164 = scalar_lea.vmem [#allocation6], 17
    %v165 = vld [vmem:[%s164] ss:$8 sm:$0x3]
    %s166 = scalar_lea.vmem [#allocation6], 18
    %v167 = vld [vmem:[%s166] ss:$8 sm:$0x3]
    %s168 = scalar_lea.vmem [#allocation6], 19
    %v169 = vld [vmem:[%s168] ss:$8 sm:$0x3]
    %s170 = scalar_lea.vmem [#allocation6], 20
    %v171 = vld [vmem:[%s170] ss:$8 sm:$0x3]
    %s172 = scalar_lea.vmem [#allocation6], 21
    %v173 = vld [vmem:[%s172] ss:$8 sm:$0x3]
    %vm178 = vcmask 1041409
    %v179 = vsel %vm178, %v145, %v143
    %v180 = vsel %vm178, %v146, %v144
    %183 = vrot.lane.b32.xlu0 %v179, 3
    %v184 = vpop.permute.xlu0 %183
    %185 = vrot.lane.b32.xlu0 %v180, 3
    %v186 = vpop.permute.xlu0 %185
    %v187 = vlaneseq
    %v188 = vand.u32 %v187, 127
    %vm189 = vcmp.lt.s32.totalorder %v188, 3
    %v190 = vsel %vm189, %v184, %v186
    %v191 = vsel %vm189, %v186, %v184
    %v193 = vperm.slane %v147, 0
    %v194 = vperm.slane %v147, 1
    %v197 = vmul.f32 %v191, %v193
    %v198 = vmul.f32 %v190, %v194
    %199 = vrot.lane.b32.xlu0 %v179, 2
    %v200 = vpop.permute.xlu0 %199
    %201 = vrot.lane.b32.xlu0 %v180, 2
    %v202 = vpop.permute.xlu0 %201
    %vm203 = vcmp.lt.s32.totalorder %v188, 2
    %v204 = vsel %vm203, %v200, %v202
    %v205 = vsel %vm203, %v202, %v200
    %v207 = vperm.slane %v149, 0
    %v208 = vperm.slane %v149, 1
    %v211 = vmul.f32 %v205, %v207
    %v212 = vmul.f32 %v204, %v208
    %213 = vrot.lane.b32.xlu0 %v179, 1
    %v214 = vpop.permute.xlu0 %213
    %215 = vrot.lane.b32.xlu0 %v180, 1
    %v216 = vpop.permute.xlu0 %215
    %vm217 = vcmp.lt.s32.totalorder %v188, 1
    %v218 = vsel %vm217, %v214, %v216
    %v219 = vsel %vm217, %v216, %v214
    %v221 = vperm.slane %v151, 0
    %v222 = vperm.slane %v151, 1
    %v225 = vmul.f32 %v219, %v221
    %v226 = vmul.f32 %v218, %v222
    %v228 = vperm.slane %v153, 0
    %v229 = vperm.slane %v153, 1
    %v232 = vmul.f32 %v143, %v228
    %v233 = vmul.f32 %v144, %v229
    %v234 = vmul.f32 %v145, %v228
    %v235 = vmul.f32 %v146, %v229
    %236 = vrot.lane.b32.xlu0 %v179, 127
    %v237 = vpop.permute.xlu0 %236
    %238 = vrot.lane.b32.xlu0 %v180, 127
    %v239 = vpop.permute.xlu0 %238
    %vm240 = vcmp.lt.s32.totalorder %v188, 127
    %v241 = vsel %vm240, %v237, %v239
    %v242 = vsel %vm240, %v239, %v237
    %v244 = vperm.slane %v155, 0
    %v245 = vperm.slane %v155, 1
    %v248 = vmul.f32 %v241, %v244
    %v249 = vmul.f32 %v242, %v245
    %250 = vrot.lane.b32.xlu0 %v179, 126
    %v251 = vpop.permute.xlu0 %250
    %252 = vrot.lane.b32.xlu0 %v180, 126
    %v253 = vpop.permute.xlu0 %252
    %vm254 = vcmp.lt.s32.totalorder %v188, 126
    %v255 = vsel %vm254, %v251, %v253
    %v256 = vsel %vm254, %v253, %v251
    %v258 = vperm.slane %v157, 0
    %v259 = vperm.slane %v157, 1
    %v262 = vmul.f32 %v255, %v258
    %v263 = vmul.f32 %v256, %v259
    %264 = vrot.lane.b32.xlu0 %v179, 125
    %v265 = vpop.permute.xlu0 %264
    %266 = vrot.lane.b32.xlu0 %v180, 125
    %v267 = vpop.permute.xlu0 %266
    %vm268 = vcmp.lt.s32.totalorder %v188, 125
    %v269 = vsel %vm268, %v265, %v267
    %v270 = vsel %vm268, %v267, %v265
    %v272 = vperm.slane %v159, 0
    %v273 = vperm.slane %v159, 1
    %v276 = vmul.f32 %v269, %v272
    %v277 = vmul.f32 %v270, %v273
    %v282 = vsel %vm178, %v135, %v121
    %v283 = vsel %vm178, %v142, %v128
    %286 = vrot.lane.b32.xlu0 %v282, 3
    %v287 = vpop.permute.xlu0 %286
    %288 = vrot.lane.b32.xlu0 %v283, 3
    %v289 = vpop.permute.xlu0 %288
    %v290 = vsel %vm189, %v287, %v289
    %v291 = vsel %vm189, %v289, %v287
    %v292 = vmul.f32 %v291, %v193
    %v293 = vmul.f32 %v290, %v194
    %294 = vrot.lane.b32.xlu0 %v282, 2
    %v295 = vpop.permute.xlu0 %294
    %296 = vrot.lane.b32.xlu0 %v283, 2
    %v297 = vpop.permute.xlu0 %296
    %v298 = vsel %vm203, %v295, %v297
    %v299 = vsel %vm203, %v297, %v295
    %v300 = vmul.f32 %v299, %v207
    %v301 = vmul.f32 %v298, %v208
    %302 = vrot.lane.b32.xlu0 %v282, 1
    %v303 = vpop.permute.xlu0 %302
    %304 = vrot.lane.b32.xlu0 %v283, 1
    %v305 = vpop.permute.xlu0 %304
    %v306 = vsel %vm217, %v303, %v305
    %v307 = vsel %vm217, %v305, %v303
    %v308 = vmul.f32 %v307, %v221
    %v309 = vmul.f32 %v306, %v222
    %v310 = vmul.f32 %v121, %v228
    %v311 = vmul.f32 %v128, %v229
    %v312 = vmul.f32 %v135, %v228
    %v313 = vmul.f32 %v142, %v229
    %314 = vrot.lane.b32.xlu0 %v282, 127
    %v315 = vpop.permute.xlu0 %314
    %316 = vrot.lane.b32.xlu0 %v283, 127
    %v317 = vpop.permute.xlu0 %316
    %v318 = vsel %vm240, %v315, %v317
    %v319 = vsel %vm240, %v317, %v315
    %v320 = vmul.f32 %v318, %v244
    %v321 = vmul.f32 %v319, %v245
    %322 = vrot.lane.b32.xlu0 %v282, 126
    %v323 = vpop.permute.xlu0 %322
    %324 = vrot.lane.b32.xlu0 %v283, 126
    %v325 = vpop.permute.xlu0 %324
    %v326 = vsel %vm254, %v323, %v325
    %v327 = vsel %vm254, %v325, %v323
    %v328 = vmul.f32 %v326, %v258
    %v329 = vmul.f32 %v327, %v259
    %330 = vrot.lane.b32.xlu0 %v282, 125
    %v331 = vpop.permute.xlu0 %330
    %332 = vrot.lane.b32.xlu0 %v283, 125
    %v333 = vpop.permute.xlu0 %332
    %v334 = vsel %vm268, %v331, %v333
    %v335 = vsel %vm268, %v333, %v331
    %v336 = vmul.f32 %v334, %v272
    %v337 = vmul.f32 %v335, %v273
    %s338 = sld [smem:[#allocation8]]
    %s339 = sld [smem:[#allocation8 + $0x31]]
    %v340 = vstv %s338
    %v341 = vmul.f32 %v197, %v340
    %v342 = vmul.f32 %v198, %v340
    %v343 = vstv %s339
    %v344 = vmul.f32 %v292, %v343
    %v345 = vmul.f32 %v293, %v343
    %v346 = vadd.f32 %v341, %v344
    %v347 = vadd.f32 %v342, %v345
    %s348 = sld [smem:[#allocation8 + $0x1]]
    %s349 = sld [smem:[#allocation8 + $0x32]]
    %v350 = vstv %s348
    %v351 = vmul.f32 %v211, %v350
    %v352 = vmul.f32 %v212, %v350
    %v353 = vstv %s349
    %v354 = vmul.f32 %v300, %v353
    %v355 = vmul.f32 %v301, %v353
    %v356 = vadd.f32 %v351, %v354
    %v357 = vadd.f32 %v352, %v355
    %s358 = sld [smem:[#allocation8 + $0x2]]
    %s359 = sld [smem:[#allocation8 + $0x33]]
    %v360 = vstv %s358
    %v361 = vmul.f32 %v225, %v360
    %v362 = vmul.f32 %v226, %v360
    %v363 = vstv %s359
    %v364 = vmul.f32 %v308, %v363
    %v365 = vmul.f32 %v309, %v363
    %v366 = vadd.f32 %v361, %v364
    %v367 = vadd.f32 %v362, %v365
    %s368 = sld [smem:[#allocation8 + $0x3]]
    %s369 = sld [smem:[#allocation8 + $0x34]]
    %v370 = vstv %s368
    %v371 = vmul.f32 %v232, %v370
    %v372 = vmul.f32 %v233, %v370
    %v373 = vmul.f32 %v234, %v370
    %v374 = vmul.f32 %v235, %v370
    %v375 = vstv %s369
    %v376 = vmul.f32 %v310, %v375
    %v377 = vmul.f32 %v311, %v375
    %v378 = vmul.f32 %v312, %v375
    %v379 = vmul.f32 %v313, %v375
    %v380 = vadd.f32 %v371, %v376
    %v381 = vadd.f32 %v372, %v377
    %v382 = vadd.f32 %v373, %v378
    %v383 = vadd.f32 %v374, %v379
    %s384 = sld [smem:[#allocation8 + $0x4]]
    %s385 = sld [smem:[#allocation8 + $0x35]]
    %v386 = vstv %s384
    %v387 = vmul.f32 %v248, %v386
    %v388 = vmul.f32 %v249, %v386
    %v389 = vstv %s385
    %v390 = vmul.f32 %v320, %v389
    %v391 = vmul.f32 %v321, %v389
    %v392 = vadd.f32 %v387, %v390
    %v393 = vadd.f32 %v388, %v391
    %s394 = sld [smem:[#allocation8 + $0x5]]
    %s395 = sld [smem:[#allocation8 + $0x36]]
    %v396 = vstv %s394
    %v397 = vmul.f32 %v262, %v396
    %v398 = vmul.f32 %v263, %v396
    %v399 = vstv %s395
    %v400 = vmul.f32 %v328, %v399
    %v401 = vmul.f32 %v329, %v399
    %v402 = vadd.f32 %v397, %v400
    %v403 = vadd.f32 %v398, %v401
    %s404 = sld [smem:[#allocation8 + $0x6]]
    %s405 = sld [smem:[#allocation8 + $0x37]]
    %v406 = vstv %s404
    %v407 = vmul.f32 %v276, %v406
    %v408 = vmul.f32 %v277, %v406
    %v409 = vstv %s405
    %v410 = vmul.f32 %v336, %v409
    %v411 = vmul.f32 %v337, %v409
    %v412 = vadd.f32 %v407, %v410
    %v413 = vadd.f32 %v408, %v411
    %v414 = vadd.f32 %v346, %v356
    %v415 = vadd.f32 %v347, %v357
    %v420 = vrot.slane %v382, 7
    %v421 = vsel %vm178, %v420, %v380
    %v422 = vrot.slane %v383, 7
    %v423 = vsel %vm178, %v422, %v381
    %v426 = vadd.f32 %v366, %v421
    %v427 = vadd.f32 %v367, %v423
    %v428 = vadd.f32 %v392, %v402
    %v429 = vadd.f32 %v393, %v403
    %v430 = vadd.f32 %v414, %v426
    %v431 = vadd.f32 %v415, %v427
    %v432 = vadd.f32 %v428, %v412
    %v433 = vadd.f32 %v429, %v413
    %v434 = vadd.f32 %v430, %v432
    %v435 = vadd.f32 %v431, %v433
    %436 = vrot.lane.b32.xlu0 %v434, 48
    %v437 = vpop.permute.xlu0 %436
    %438 = vrot.lane.b32.xlu0 %v435, 48
    %v439 = vpop.permute.xlu0 %438
    %vm440 = vcmp.lt.s32.totalorder %v188, 48
    %v441 = vsel %vm440, %v437, %v439
    %v442 = vsel %vm440, %v439, %v437
    %v444 = vperm.slane %v161, 0
    %v445 = vperm.slane %v161, 1
    %v448 = vmul.f32 %v442, %v444
    %v449 = vmul.f32 %v441, %v445
    %s450 = sld [smem:[#allocation8 + $0x7]]
    %s451 = sld [smem:[#allocation8 + $0x38]]
    %v452 = vstv %s450
    %v453 = vmul.f32 %v197, %v452
    %v454 = vmul.f32 %v198, %v452
    %v455 = vstv %s451
    %v456 = vmul.f32 %v292, %v455
    %v457 = vmul.f32 %v293, %v455
    %v458 = vadd.f32 %v453, %v456
    %v459 = vadd.f32 %v454, %v457
    %s460 = sld [smem:[#allocation8 + $0x8]]
    %s461 = sld [smem:[#allocation8 + $0x39]]
    %v462 = vstv %s460
    %v463 = vmul.f32 %v211, %v462
    %v464 = vmul.f32 %v212, %v462
    %v465 = vstv %s461
    %v466 = vmul.f32 %v300, %v465
    %v467 = vmul.f32 %v301, %v465
    %v468 = vadd.f32 %v463, %v466
    %v469 = vadd.f32 %v464, %v467
    %s470 = sld [smem:[#allocation8 + $0x9]]
    %s471 = sld [smem:[#allocation8 + $0x3a]]
    %v472 = vstv %s470
    %v473 = vmul.f32 %v225, %v472
    %v474 = vmul.f32 %v226, %v472
    %v475 = vstv %s471
    %v476 = vmul.f32 %v308, %v475
    %v477 = vmul.f32 %v309, %v475
    %v478 = vadd.f32 %v473, %v476
    %v479 = vadd.f32 %v474, %v477
    %s480 = sld [smem:[#allocation8 + $0xa]]
    %s481 = sld [smem:[#allocation8 + $0x3b]]
    %v482 = vstv %s480
    %v483 = vmul.f32 %v232, %v482
    %v484 = vmul.f32 %v233, %v482
    %v485 = vmul.f32 %v234, %v482
    %v486 = vmul.f32 %v235, %v482
    %v487 = vstv %s481
    %v488 = vmul.f32 %v310, %v487
    %v489 = vmul.f32 %v311, %v487
    %v490 = vmul.f32 %v312, %v487
    %v491 = vmul.f32 %v313, %v487
    %v492 = vadd.f32 %v483, %v488
    %v493 = vadd.f32 %v484, %v489
    %v494 = vadd.f32 %v485, %v490
    %v495 = vadd.f32 %v486, %v491
    %s496 = sld [smem:[#allocation8 + $0xb]]
    %s497 = sld [smem:[#allocation8 + $0x3c]]
    %v498 = vstv %s496
    %v499 = vmul.f32 %v248, %v498
    %v500 = vmul.f32 %v249, %v498
    %v501 = vstv %s497
    %v502 = vmul.f32 %v320, %v501
    %v503 = vmul.f32 %v321, %v501
    %v504 = vadd.f32 %v499, %v502
    %v505 = vadd.f32 %v500, %v503
    %s506 = sld [smem:[#allocation8 + $0xc]]
    %s507 = sld [smem:[#allocation8 + $0x3d]]
    %v508 = vstv %s506
    %v509 = vmul.f32 %v262, %v508
    %v510 = vmul.f32 %v263, %v508
    %v511 = vstv %s507
    %v512 = vmul.f32 %v328, %v511
    %v513 = vmul.f32 %v329, %v511
    %v514 = vadd.f32 %v509, %v512
    %v515 = vadd.f32 %v510, %v513
    %s516 = sld [smem:[#allocation8 + $0xd]]
    %s517 = sld [smem:[#allocation8 + $0x3e]]
    %v518 = vstv %s516
    %v519 = vmul.f32 %v276, %v518
    %v520 = vmul.f32 %v277, %v518
    %v521 = vstv %s517
    %v522 = vmul.f32 %v336, %v521
    %v523 = vmul.f32 %v337, %v521
    %v524 = vadd.f32 %v519, %v522
    %v525 = vadd.f32 %v520, %v523
    %v526 = vadd.f32 %v458, %v468
    %v527 = vadd.f32 %v459, %v469
    %v532 = vrot.slane %v494, 7
    %v533 = vsel %vm178, %v532, %v492
    %v534 = vrot.slane %v495, 7
    %v535 = vsel %vm178, %v534, %v493
    %v538 = vadd.f32 %v478, %v533
    %v539 = vadd.f32 %v479, %v535
    %v540 = vadd.f32 %v504, %v514
    %v541 = vadd.f32 %v505, %v515
    %v542 = vadd.f32 %v526, %v538
    %v543 = vadd.f32 %v527, %v539
    %v544 = vadd.f32 %v540, %v524
    %v545 = vadd.f32 %v541, %v525
    %v546 = vadd.f32 %v542, %v544
    %v547 = vadd.f32 %v543, %v545
    %548 = vrot.lane.b32.xlu0 %v546, 32
    %v549 = vpop.permute.xlu0 %548
    %550 = vrot.lane.b32.xlu0 %v547, 32
    %v551 = vpop.permute.xlu0 %550
    %vm552 = vcmp.lt.s32.totalorder %v188, 32
    %v553 = vsel %vm552, %v549, %v551
    %v554 = vsel %vm552, %v551, %v549
    %v556 = vperm.slane %v163, 0
    %v557 = vperm.slane %v163, 1
    %v560 = vmul.f32 %v554, %v556
    %v561 = vmul.f32 %v553, %v557
    %s562 = sld [smem:[#allocation8 + $0xe]]
    %s563 = sld [smem:[#allocation8 + $0x3f]]
    %v564 = vstv %s562
    %v565 = vmul.f32 %v197, %v564
    %v566 = vmul.f32 %v198, %v564
    %v567 = vstv %s563
    %v568 = vmul.f32 %v292, %v567
    %v569 = vmul.f32 %v293, %v567
    %v570 = vadd.f32 %v565, %v568
    %v571 = vadd.f32 %v566, %v569
    %s572 = sld [smem:[#allocation8 + $0xf]]
    %s573 = sld [smem:[#allocation8 + $0x40]]
    %v574 = vstv %s572
    %v575 = vmul.f32 %v211, %v574
    %v576 = vmul.f32 %v212, %v574
    %v577 = vstv %s573
    %v578 = vmul.f32 %v300, %v577
    %v579 = vmul.f32 %v301, %v577
    %v580 = vadd.f32 %v575, %v578
    %v581 = vadd.f32 %v576, %v579
    %s582 = sld [smem:[#allocation8 + $0x10]]
    %s583 = sld [smem:[#allocation8 + $0x41]]
    %v584 = vstv %s582
    %v585 = vmul.f32 %v225, %v584
    %v586 = vmul.f32 %v226, %v584
    %v587 = vstv %s583
    %v588 = vmul.f32 %v308, %v587
    %v589 = vmul.f32 %v309, %v587
    %v590 = vadd.f32 %v585, %v588
    %v591 = vadd.f32 %v586, %v589
    %s592 = sld [smem:[#allocation8 + $0x11]]
    %s593 = sld [smem:[#allocation8 + $0x42]]
    %v594 = vstv %s592
    %v595 = vmul.f32 %v232, %v594
    %v596 = vmul.f32 %v233, %v594
    %v597 = vmul.f32 %v234, %v594
    %v598 = vmul.f32 %v235, %v594
    %v599 = vstv %s593
    %v600 = vmul.f32 %v310, %v599
    %v601 = vmul.f32 %v311, %v599
    %v602 = vmul.f32 %v312, %v599
    %v603 = vmul.f32 %v313, %v599
    %v604 = vadd.f32 %v595, %v600
    %v605 = vadd.f32 %v596, %v601
    %v606 = vadd.f32 %v597, %v602
    %v607 = vadd.f32 %v598, %v603
    %s608 = sld [smem:[#allocation8 + $0x12]]
    %s609 = sld [smem:[#allocation8 + $0x43]]
    %v610 = vstv %s608
    %v611 = vmul.f32 %v248, %v610
    %v612 = vmul.f32 %v249, %v610
    %v613 = vstv %s609
    %v614 = vmul.f32 %v320, %v613
    %v615 = vmul.f32 %v321, %v613
    %v616 = vadd.f32 %v611, %v614
    %v617 = vadd.f32 %v612, %v615
    %s618 = sld [smem:[#allocation8 + $0x13]]
    %s619 = sld [smem:[#allocation8 + $0x44]]
    %v620 = vstv %s618
    %v621 = vmul.f32 %v262, %v620
    %v622 = vmul.f32 %v263, %v620
    %v623 = vstv %s619
    %v624 = vmul.f32 %v328, %v623
    %v625 = vmul.f32 %v329, %v623
    %v626 = vadd.f32 %v621, %v624
    %v627 = vadd.f32 %v622, %v625
    %s628 = sld [smem:[#allocation8 + $0x14]]
    %s629 = sld [smem:[#allocation8 + $0x45]]
    %v630 = vstv %s628
    %v631 = vmul.f32 %v276, %v630
    %v632 = vmul.f32 %v277, %v630
    %v633 = vstv %s629
    %v634 = vmul.f32 %v336, %v633
    %v635 = vmul.f32 %v337, %v633
    %v636 = vadd.f32 %v631, %v634
    %v637 = vadd.f32 %v632, %v635
    %v638 = vadd.f32 %v570, %v580
    %v639 = vadd.f32 %v571, %v581
    %v644 = vrot.slane %v606, 7
    %v645 = vsel %vm178, %v644, %v604
    %v646 = vrot.slane %v607, 7
    %v647 = vsel %vm178, %v646, %v605
    %v650 = vadd.f32 %v590, %v645
    %v651 = vadd.f32 %v591, %v647
    %v652 = vadd.f32 %v616, %v626
    %v653 = vadd.f32 %v617, %v627
    %v654 = vadd.f32 %v638, %v650
    %v655 = vadd.f32 %v639, %v651
    %v656 = vadd.f32 %v652, %v636
    %v657 = vadd.f32 %v653, %v637
    %v658 = vadd.f32 %v654, %v656
    %v659 = vadd.f32 %v655, %v657
    %660 = vrot.lane.b32.xlu0 %v658, 16
    %v661 = vpop.permute.xlu0 %660
    %662 = vrot.lane.b32.xlu0 %v659, 16
    %v663 = vpop.permute.xlu0 %662
    %vm664 = vcmp.lt.s32.totalorder %v188, 16
    %v665 = vsel %vm664, %v661, %v663
    %v666 = vsel %vm664, %v663, %v661
    %v668 = vperm.slane %v165, 0
    %v669 = vperm.slane %v165, 1
    %v672 = vmul.f32 %v666, %v668
    %v673 = vmul.f32 %v665, %v669
    %s674 = sld [smem:[#allocation8 + $0x15]]
    %s675 = sld [smem:[#allocation8 + $0x46]]
    %v676 = vstv %s674
    %v677 = vmul.f32 %v197, %v676
    %v678 = vmul.f32 %v198, %v676
    %v679 = vstv %s675
    %v680 = vmul.f32 %v292, %v679
    %v681 = vmul.f32 %v293, %v679
    %v682 = vadd.f32 %v677, %v680
    %v683 = vadd.f32 %v678, %v681
    %s684 = sld [smem:[#allocation8 + $0x16]]
    %s685 = sld [smem:[#allocation8 + $0x47]]
    %v686 = vstv %s684
    %v687 = vmul.f32 %v211, %v686
    %v688 = vmul.f32 %v212, %v686
    %v689 = vstv %s685
    %v690 = vmul.f32 %v300, %v689
    %v691 = vmul.f32 %v301, %v689
    %v692 = vadd.f32 %v687, %v690
    %v693 = vadd.f32 %v688, %v691
    %s694 = sld [smem:[#allocation8 + $0x17]]
    %s695 = sld [smem:[#allocation8 + $0x48]]
    %v696 = vstv %s694
    %v697 = vmul.f32 %v225, %v696
    %v698 = vmul.f32 %v226, %v696
    %v699 = vstv %s695
    %v700 = vmul.f32 %v308, %v699
    %v701 = vmul.f32 %v309, %v699
    %v702 = vadd.f32 %v697, %v700
    %v703 = vadd.f32 %v698, %v701
    %s704 = sld [smem:[#allocation8 + $0x18]]
    %s705 = sld [smem:[#allocation8 + $0x49]]
    %v706 = vstv %s704
    %v707 = vmul.f32 %v232, %v706
    %v708 = vmul.f32 %v233, %v706
    %v709 = vmul.f32 %v234, %v706
    %v710 = vmul.f32 %v235, %v706
    %v711 = vstv %s705
    %v712 = vmul.f32 %v310, %v711
    %v713 = vmul.f32 %v311, %v711
    %v714 = vmul.f32 %v312, %v711
    %v715 = vmul.f32 %v313, %v711
    %v716 = vadd.f32 %v707, %v712
    %v717 = vadd.f32 %v708, %v713
    %v718 = vadd.f32 %v709, %v714
    %v719 = vadd.f32 %v710, %v715
    %s720 = sld [smem:[#allocation8 + $0x19]]
    %s721 = sld [smem:[#allocation8 + $0x4a]]
    %v722 = vstv %s720
    %v723 = vmul.f32 %v248, %v722
    %v724 = vmul.f32 %v249, %v722
    %v725 = vstv %s721
    %v726 = vmul.f32 %v320, %v725
    %v727 = vmul.f32 %v321, %v725
    %v728 = vadd.f32 %v723, %v726
    %v729 = vadd.f32 %v724, %v727
    %s730 = sld [smem:[#allocation8 + $0x1a]]
    %s731 = sld [smem:[#allocation8 + $0x4b]]
    %v732 = vstv %s730
    %v733 = vmul.f32 %v262, %v732
    %v734 = vmul.f32 %v263, %v732
    %v735 = vstv %s731
    %v736 = vmul.f32 %v328, %v735
    %v737 = vmul.f32 %v329, %v735
    %v738 = vadd.f32 %v733, %v736
    %v739 = vadd.f32 %v734, %v737
    %s740 = sld [smem:[#allocation8 + $0x1b]]
    %s741 = sld [smem:[#allocation8 + $0x4c]]
    %v742 = vstv %s740
    %v743 = vmul.f32 %v276, %v742
    %v744 = vmul.f32 %v277, %v742
    %v745 = vstv %s741
    %v746 = vmul.f32 %v336, %v745
    %v747 = vmul.f32 %v337, %v745
    %v748 = vadd.f32 %v743, %v746
    %v749 = vadd.f32 %v744, %v747
    %v750 = vadd.f32 %v682, %v692
    %v751 = vadd.f32 %v683, %v693
    %v756 = vrot.slane %v718, 7
    %v757 = vsel %vm178, %v756, %v716
    %v758 = vrot.slane %v719, 7
    %v759 = vsel %vm178, %v758, %v717
    %v762 = vadd.f32 %v702, %v757
    %v763 = vadd.f32 %v703, %v759
    %v764 = vadd.f32 %v728, %v738
    %v765 = vadd.f32 %v729, %v739
    %v766 = vadd.f32 %v750, %v762
    %v767 = vadd.f32 %v751, %v763
    %v768 = vadd.f32 %v764, %v748
    %v769 = vadd.f32 %v765, %v749
    %v770 = vadd.f32 %v766, %v768
    %v771 = vadd.f32 %v767, %v769
    %v773 = vperm.slane %v167, 0
    %v774 = vperm.slane %v167, 1
    %v777 = vmul.f32 %v770, %v773
    %v778 = vmul.f32 %v771, %v774
    %s779 = sld [smem:[#allocation8 + $0x1c]]
    %s780 = sld [smem:[#allocation8 + $0x4d]]
    %v781 = vstv %s779
    %v782 = vmul.f32 %v197, %v781
    %v783 = vmul.f32 %v198, %v781
    %v784 = vstv %s780
    %v785 = vmul.f32 %v292, %v784
    %v786 = vmul.f32 %v293, %v784
    %v787 = vadd.f32 %v782, %v785
    %v788 = vadd.f32 %v783, %v786
    %s789 = sld [smem:[#allocation8 + $0x1d]]
    %s790 = sld [smem:[#allocation8 + $0x4e]]
    %v791 = vstv %s789
    %v792 = vmul.f32 %v211, %v791
    %v793 = vmul.f32 %v212, %v791
    %v794 = vstv %s790
    %v795 = vmul.f32 %v300, %v794
    %v796 = vmul.f32 %v301, %v794
    %v797 = vadd.f32 %v792, %v795
    %v798 = vadd.f32 %v793, %v796
    %s799 = sld [smem:[#allocation8 + $0x1e]]
    %s800 = sld [smem:[#allocation8 + $0x4f]]
    %v801 = vstv %s799
    %v802 = vmul.f32 %v225, %v801
    %v803 = vmul.f32 %v226, %v801
    %v804 = vstv %s800
    %v805 = vmul.f32 %v308, %v804
    %v806 = vmul.f32 %v309, %v804
    %v807 = vadd.f32 %v802, %v805
    %v808 = vadd.f32 %v803, %v806
    %s809 = sld [smem:[#allocation8 + $0x1f]]
    %s810 = sld [smem:[#allocation8 + $0x50]]
    %v811 = vstv %s809
    %v812 = vmul.f32 %v232, %v811
    %v813 = vmul.f32 %v233, %v811
    %v814 = vmul.f32 %v234, %v811
    %v815 = vmul.f32 %v235, %v811
    %v816 = vstv %s810
    %v817 = vmul.f32 %v310, %v816
    %v818 = vmul.f32 %v311, %v816
    %v819 = vmul.f32 %v312, %v816
    %v820 = vmul.f32 %v313, %v816
    %v821 = vadd.f32 %v812, %v817
    %v822 = vadd.f32 %v813, %v818
    %v823 = vadd.f32 %v814, %v819
    %v824 = vadd.f32 %v815, %v820
    %s825 = sld [smem:[#allocation8 + $0x20]]
    %s826 = sld [smem:[#allocation8 + $0x51]]
    %v827 = vstv %s825
    %v828 = vmul.f32 %v248, %v827
    %v829 = vmul.f32 %v249, %v827
    %v830 = vstv %s826
    %v831 = vmul.f32 %v320, %v830
    %v832 = vmul.f32 %v321, %v830
    %v833 = vadd.f32 %v828, %v831
    %v834 = vadd.f32 %v829, %v832
    %s835 = sld [smem:[#allocation8 + $0x21]]
    %s836 = sld [smem:[#allocation8 + $0x52]]
    %v837 = vstv %s835
    %v838 = vmul.f32 %v262, %v837
    %v839 = vmul.f32 %v263, %v837
    %v840 = vstv %s836
    %v841 = vmul.f32 %v328, %v840
    %v842 = vmul.f32 %v329, %v840
    %v843 = vadd.f32 %v838, %v841
    %v844 = vadd.f32 %v839, %v842
    %s845 = sld [smem:[#allocation8 + $0x22]]
    %s846 = sld [smem:[#allocation8 + $0x53]]
    %v847 = vstv %s845
    %v848 = vmul.f32 %v276, %v847
    %v849 = vmul.f32 %v277, %v847
    %v850 = vstv %s846
    %v851 = vmul.f32 %v336, %v850
    %v852 = vmul.f32 %v337, %v850
    %v853 = vadd.f32 %v848, %v851
    %v854 = vadd.f32 %v849, %v852
    %v855 = vadd.f32 %v787, %v797
    %v856 = vadd.f32 %v788, %v798
    %v861 = vrot.slane %v823, 7
    %v862 = vsel %vm178, %v861, %v821
    %v863 = vrot.slane %v824, 7
    %v864 = vsel %vm178, %v863, %v822
    %v867 = vadd.f32 %v807, %v862
    %v868 = vadd.f32 %v808, %v864
    %v869 = vadd.f32 %v833, %v843
    %v870 = vadd.f32 %v834, %v844
    %v871 = vadd.f32 %v855, %v867
    %v872 = vadd.f32 %v856, %v868
    %v873 = vadd.f32 %v869, %v853
    %v874 = vadd.f32 %v870, %v854
    %v875 = vadd.f32 %v871, %v873
    %v876 = vadd.f32 %v872, %v874
    %877 = vrot.lane.b32.xlu0 %v875, 112
    %v878 = vpop.permute.xlu0 %877
    %879 = vrot.lane.b32.xlu0 %v876, 112
    %v880 = vpop.permute.xlu0 %879
    %vm881 = vcmp.lt.s32.totalorder %v188, 112
    %v882 = vsel %vm881, %v878, %v880
    %v883 = vsel %vm881, %v880, %v878
    %v885 = vperm.slane %v169, 0
    %v886 = vperm.slane %v169, 1
    %v889 = vmul.f32 %v882, %v885
    %v890 = vmul.f32 %v883, %v886
    %s891 = sld [smem:[#allocation8 + $0x23]]
    %s892 = sld [smem:[#allocation8 + $0x54]]
    %v893 = vstv %s891
    %v894 = vmul.f32 %v197, %v893
    %v895 = vmul.f32 %v198, %v893
    %v896 = vstv %s892
    %v897 = vmul.f32 %v292, %v896
    %v898 = vmul.f32 %v293, %v896
    %v899 = vadd.f32 %v894, %v897
    %v900 = vadd.f32 %v895, %v898
    %s901 = sld [smem:[#allocation8 + $0x24]]
    %s902 = sld [smem:[#allocation8 + $0x55]]
    %v903 = vstv %s901
    %v904 = vmul.f32 %v211, %v903
    %v905 = vmul.f32 %v212, %v903
    %v906 = vstv %s902
    %v907 = vmul.f32 %v300, %v906
    %v908 = vmul.f32 %v301, %v906
    %v909 = vadd.f32 %v904, %v907
    %v910 = vadd.f32 %v905, %v908
    %s911 = sld [smem:[#allocation8 + $0x25]]
    %s912 = sld [smem:[#allocation8 + $0x56]]
    %v913 = vstv %s911
    %v914 = vmul.f32 %v225, %v913
    %v915 = vmul.f32 %v226, %v913
    %v916 = vstv %s912
    %v917 = vmul.f32 %v308, %v916
    %v918 = vmul.f32 %v309, %v916
    %v919 = vadd.f32 %v914, %v917
    %v920 = vadd.f32 %v915, %v918
    %s921 = sld [smem:[#allocation8 + $0x26]]
    %s922 = sld [smem:[#allocation8 + $0x57]]
    %v923 = vstv %s921
    %v924 = vmul.f32 %v232, %v923
    %v925 = vmul.f32 %v233, %v923
    %v926 = vmul.f32 %v234, %v923
    %v927 = vmul.f32 %v235, %v923
    %v928 = vstv %s922
    %v929 = vmul.f32 %v310, %v928
    %v930 = vmul.f32 %v311, %v928
    %v931 = vmul.f32 %v312, %v928
    %v932 = vmul.f32 %v313, %v928
    %v933 = vadd.f32 %v924, %v929
    %v934 = vadd.f32 %v925, %v930
    %v935 = vadd.f32 %v926, %v931
    %v936 = vadd.f32 %v927, %v932
    %s937 = sld [smem:[#allocation8 + $0x27]]
    %s938 = sld [smem:[#allocation8 + $0x58]]
    %v939 = vstv %s937
    %v940 = vmul.f32 %v248, %v939
    %v941 = vmul.f32 %v249, %v939
    %v942 = vstv %s938
    %v943 = vmul.f32 %v320, %v942
    %v944 = vmul.f32 %v321, %v942
    %v945 = vadd.f32 %v940, %v943
    %v946 = vadd.f32 %v941, %v944
    %s947 = sld [smem:[#allocation8 + $0x28]]
    %s948 = sld [smem:[#allocation8 + $0x59]]
    %v949 = vstv %s947
    %v950 = vmul.f32 %v262, %v949
    %v951 = vmul.f32 %v263, %v949
    %v952 = vstv %s948
    %v953 = vmul.f32 %v328, %v952
    %v954 = vmul.f32 %v329, %v952
    %v955 = vadd.f32 %v950, %v953
    %v956 = vadd.f32 %v951, %v954
    %s957 = sld [smem:[#allocation8 + $0x29]]
    %s958 = sld [smem:[#allocation8 + $0x5a]]
    %v959 = vstv %s957
    %v960 = vmul.f32 %v276, %v959
    %v961 = vmul.f32 %v277, %v959
    %v962 = vstv %s958
    %v963 = vmul.f32 %v336, %v962
    %v964 = vmul.f32 %v337, %v962
    %v965 = vadd.f32 %v960, %v963
    %v966 = vadd.f32 %v961, %v964
    %v967 = vadd.f32 %v899, %v909
    %v968 = vadd.f32 %v900, %v910
    %v973 = vrot.slane %v935, 7
    %v974 = vsel %vm178, %v973, %v933
    %v975 = vrot.slane %v936, 7
    %v976 = vsel %vm178, %v975, %v934
    %v979 = vadd.f32 %v919, %v974
    %v980 = vadd.f32 %v920, %v976
    %v981 = vadd.f32 %v945, %v955
    %v982 = vadd.f32 %v946, %v956
    %v983 = vadd.f32 %v967, %v979
    %v984 = vadd.f32 %v968, %v980
    %v985 = vadd.f32 %v981, %v965
    %v986 = vadd.f32 %v982, %v966
    %v987 = vadd.f32 %v983, %v985
    %v988 = vadd.f32 %v984, %v986
    %989 = vrot.lane.b32.xlu0 %v987, 96
    %v990 = vpop.permute.xlu0 %989
    %991 = vrot.lane.b32.xlu0 %v988, 96
    %v992 = vpop.permute.xlu0 %991
    %vm993 = vcmp.lt.s32.totalorder %v188, 96
    %v994 = vsel %vm993, %v990, %v992
    %v995 = vsel %vm993, %v992, %v990
    %v997 = vperm.slane %v171, 0
    %v998 = vperm.slane %v171, 1
    %v1001 = vmul.f32 %v994, %v997
    %v1002 = vmul.f32 %v995, %v998
    %s1003 = sld [smem:[#allocation8 + $0x2a]]
    %s1004 = sld [smem:[#allocation8 + $0x5b]]
    %v1005 = vstv %s1003
    %v1006 = vmul.f32 %v197, %v1005
    %v1007 = vmul.f32 %v198, %v1005
    %v1008 = vstv %s1004
    %v1009 = vmul.f32 %v292, %v1008
    %v1010 = vmul.f32 %v293, %v1008
    %v1011 = vadd.f32 %v1006, %v1009
    %v1012 = vadd.f32 %v1007, %v1010
    %s1013 = sld [smem:[#allocation8 + $0x2b]]
    %s1014 = sld [smem:[#allocation8 + $0x5c]]
    %v1015 = vstv %s1013
    %v1016 = vmul.f32 %v211, %v1015
    %v1017 = vmul.f32 %v212, %v1015
    %v1018 = vstv %s1014
    %v1019 = vmul.f32 %v300, %v1018
    %v1020 = vmul.f32 %v301, %v1018
    %v1021 = vadd.f32 %v1016, %v1019
    %v1022 = vadd.f32 %v1017, %v1020
    %s1023 = sld [smem:[#allocation8 + $0x2c]]
    %s1024 = sld [smem:[#allocation8 + $0x5d]]
    %v1025 = vstv %s1023
    %v1026 = vmul.f32 %v225, %v1025
    %v1027 = vmul.f32 %v226, %v1025
    %v1028 = vstv %s1024
    %v1029 = vmul.f32 %v308, %v1028
    %v1030 = vmul.f32 %v309, %v1028
    %v1031 = vadd.f32 %v1026, %v1029
    %v1032 = vadd.f32 %v1027, %v1030
    %s1033 = sld [smem:[#allocation8 + $0x2d]]
    %s1034 = sld [smem:[#allocation8 + $0x5e]]
    %v1035 = vstv %s1033
    %v1036 = vmul.f32 %v232, %v1035
    %v1037 = vmul.f32 %v233, %v1035
    %v1038 = vmul.f32 %v234, %v1035
    %v1039 = vmul.f32 %v235, %v1035
    %v1040 = vstv %s1034
    %v1041 = vmul.f32 %v310, %v1040
    %v1042 = vmul.f32 %v311, %v1040
    %v1043 = vmul.f32 %v312, %v1040
    %v1044 = vmul.f32 %v313, %v1040
    %v1045 = vadd.f32 %v1036, %v1041
    %v1046 = vadd.f32 %v1037, %v1042
    %v1047 = vadd.f32 %v1038, %v1043
    %v1048 = vadd.f32 %v1039, %v1044
    %s1049 = sld [smem:[#allocation8 + $0x2e]]
    %s1050 = sld [smem:[#allocation8 + $0x5f]]
    %v1051 = vstv %s1049
    %v1052 = vmul.f32 %v248, %v1051
    %v1053 = vmul.f32 %v249, %v1051
    %v1054 = vstv %s1050
    %v1055 = vmul.f32 %v320, %v1054
    %v1056 = vmul.f32 %v321, %v1054
    %v1057 = vadd.f32 %v1052, %v1055
    %v1058 = vadd.f32 %v1053, %v1056
    %s1059 = sld [smem:[#allocation8 + $0x2f]]
    %s1060 = sld [smem:[#allocation8 + $0x60]]
    %v1061 = vstv %s1059
    %v1062 = vmul.f32 %v262, %v1061
    %v1063 = vmul.f32 %v263, %v1061
    %v1064 = vstv %s1060
    %v1065 = vmul.f32 %v328, %v1064
    %v1066 = vmul.f32 %v329, %v1064
    %v1067 = vadd.f32 %v1062, %v1065
    %v1068 = vadd.f32 %v1063, %v1066
    %s1069 = sld [smem:[#allocation8 + $0x30]]
    %s1070 = sld [smem:[#allocation8 + $0x61]]
    %v1071 = vstv %s1069
    %v1072 = vmul.f32 %v276, %v1071
    %v1073 = vmul.f32 %v277, %v1071
    %v1074 = vstv %s1070
    %v1075 = vmul.f32 %v336, %v1074
    %v1076 = vmul.f32 %v337, %v1074
    %v1077 = vadd.f32 %v1072, %v1075
    %v1078 = vadd.f32 %v1073, %v1076
    %v1079 = vadd.f32 %v1011, %v1021
    %v1080 = vadd.f32 %v1012, %v1022
    %v1085 = vrot.slane %v1047, 7
    %v1086 = vsel %vm178, %v1085, %v1045
    %v1087 = vrot.slane %v1048, 7
    %v1088 = vsel %vm178, %v1087, %v1046
    %v1091 = vadd.f32 %v1031, %v1086
    %v1092 = vadd.f32 %v1032, %v1088
    %v1093 = vadd.f32 %v1057, %v1067
    %v1094 = vadd.f32 %v1058, %v1068
    %v1095 = vadd.f32 %v1079, %v1091
    %v1096 = vadd.f32 %v1080, %v1092
    %v1097 = vadd.f32 %v1093, %v1077
    %v1098 = vadd.f32 %v1094, %v1078
    %v1099 = vadd.f32 %v1095, %v1097
    %v1100 = vadd.f32 %v1096, %v1098
    %1101 = vrot.lane.b32.xlu0 %v1099, 80
    %v1102 = vpop.permute.xlu0 %1101
    %1103 = vrot.lane.b32.xlu0 %v1100, 80
    %v1104 = vpop.permute.xlu0 %1103
    %vm1105 = vcmp.lt.s32.totalorder %v188, 80
    %v1106 = vsel %vm1105, %v1102, %v1104
    %v1107 = vsel %vm1105, %v1104, %v1102
    %v1109 = vperm.slane %v173, 0
    %v1110 = vperm.slane %v173, 1
    %v1113 = vmul.f32 %v1106, %v1109
    %v1114 = vmul.f32 %v1107, %v1110
    %v1115 = vadd.f32 %v448, %v560
    %v1116 = vadd.f32 %v449, %v561
    %v1117 = vadd.f32 %v672, %v777
    %v1118 = vadd.f32 %v673, %v778
    %v1119 = vadd.f32 %v889, %v1001
    %v1120 = vadd.f32 %v890, %v1002
    %v1121 = vadd.f32 %v1115, %v1117
    %v1122 = vadd.f32 %v1116, %v1118
    %v1123 = vadd.f32 %v1119, %v1113
    %v1124 = vadd.f32 %v1120, %v1114
    %v1125 = vadd.f32 %v1121, %v1123
    %v1126 = vadd.f32 %v1122, %v1124
    %v1127 = vxor.u32 %v1125, 2147483648
    %v1128 = vxor.u32 %v1126, 2147483648
    %v1129 = vmul.f32 %v1127, 1.442695
    %v1130 = vpow.pop %v1129
    %v1131 = vmul.f32 %v1128, 1.442695
    %v1132 = vpow.pop %v1131
    %v1133 = vadd.f32 %v1130, 1.0
    %v1134 = vadd.f32 %v1132, 1.0
    %v1135 = vrcp.pop %v1133
    %v1136 = vmul.f32 %v1133, %v1135
    %v1137 = vsub.f32 1.0, %v1136
    %v1138 = vmul.f32 %v1135, %v1137
    %v1139 = vadd.f32 %v1135, %v1138
    %vm1140 = vweird.f32 %v1133
    %vm1141 = vweird.f32 %v1135
    %vm1142 = vmor %vm1140, %vm1141
    %v1143 = vsel %vm1142, %v1135, %v1139
    %v1144 = vand.u32 2147483647, %v1133
    %vm1145 = vcmp.eq.f32.partialorder %v1144, 8.507059e+37
    %v1146 = vand.u32 %v1133, 2147483648
    %v1147 = vor.u32 1.1754944e-38, %v1146
    %v1148 = vsel %vm1145, %v1147, %v1143
    %v1149 = vmul.f32 1.0, %v1148
    %v1150 = vrcp.pop %v1134
    %v1151 = vmul.f32 %v1134, %v1150
    %v1152 = vsub.f32 1.0, %v1151
    %v1153 = vmul.f32 %v1150, %v1152
    %v1154 = vadd.f32 %v1150, %v1153
    %vm1155 = vweird.f32 %v1134
    %vm1156 = vweird.f32 %v1150
    %vm1157 = vmor %vm1155, %vm1156
    %v1158 = vsel %vm1157, %v1150, %v1154
    %v1159 = vand.u32 2147483647, %v1134
    %vm1160 = vcmp.eq.f32.partialorder %v1159, 8.507059e+37
    %v1161 = vand.u32 %v1134, 2147483648
    %v1162 = vor.u32 1.1754944e-38, %v1161
    %v1163 = vsel %vm1160, %v1162, %v1158
    %v1164 = vmul.f32 1.0, %v1163
    %v1167 = vrot.slane %v1164, 7
    %vm1168 = vcmask 1040384
    %v1169 = vsel %vm1168, %v1149, %v1167
    %v1170 = vsel %vm178, %v1149, %v1167
    %v1171 = vrot.slane %v1170, 1
    %v1172 = vperm.slane %v1169, 0
    %v1173 = vperm.slane %v1169, 1
    %v1174 = vperm.slane %v1171, 0
    %v1175 = vperm.slane %v1171, 1
    %1180 = vst [vmem:[#allocation1] ss:$2 sm:$0xff] %v60
    %v1181 = vld.sshfl [vmem:[#allocation1] sm:$0xff pattern:$0x75316420]
    %v1182 = vld.sshfl [vmem:[#allocation1 + $0x8] sm:$0xff pattern:$0x75316420]
    %s1183 = scalar_lea.vmem [#allocation1], 16
    %1184 = vst [vmem:[%s1183] ss:$2 sm:$0xff] %v61
    %v1185 = vld.sshfl [vmem:[#allocation1 + $0x10] sm:$0xff pattern:$0x75316420]
    %v1186 = vld.sshfl [vmem:[#allocation1 + $0x18] sm:$0xff pattern:$0x75316420]
    %v1191 = vmul.f32 %v1172, %v1181
    %v1192 = vmul.f32 %v1173, %v1182
    %v1193 = vmul.f32 %v1174, %v1185
    %v1194 = vmul.f32 %v1175, %v1186
    %v1199 = vrot.slane %v1192, 4
    %v1200 = vrot.slane %v1194, 4
    %v1201 = vsel %vm75, %v1191, %v1199
    %v1202 = vsel %vm75, %v1193, %v1200
    %1205 = vst [vmem:[#allocation9] sm:$0xff] %v1201
    %1206 = vst [vmem:[#allocation9 + $0x8] sm:$0xff] %v1202
    // Predicated region
    $region26: #{tpu_custom_call.1} parent=1 // pred_check
      _
    $region27: #{tpu_custom_call.1} parent=1 // pred_check_branch
      %1208 = sbr.rel (0) target = $region29
    $region28: #{tpu_custom_call.1} parent=1 // pred_region
      %1210 = vsyncadd [#allocation4], 0
      %s1211 = sshll.u32 [#allocation9], 4
      %s1212 = int_to_ptr.vmem [resolvable:$true] %s1211
      %s1213 = sshll.u32 %s3, 4
      %s1214 = int_to_ptr.hbm [resolvable:$true] %s1213
      %1219 = dma.vmem_to_hbm [thread:$0]  %s1212, 256, %s1214, [#allocation4], 128, 128, 8
    $region29: #{tpu_custom_call.1} parent=1 // pred_fallthru
      _
    // Predicated region
    $region30: #{tpu_custom_call.1} parent=1 // pred_check
      _
    $region31: #{tpu_custom_call.1} parent=1 // pred_check_branch
      %1221 = sbr.rel (0) target = $region33
    $region32: #{tpu_custom_call.1} parent=1 // pred_region
      %1223 = dma.done [#allocation4], 256
    $region33: #{tpu_custom_call.1} parent=1 // pred_fallthru
      _
    %1224 = vsyncpa [#allocation3], 1
    %1225 = vsyncpa [#allocation7], 1
    %1226 = vsyncpa [#allocation4], 1
    %1227 = vsyncpa [#allocation5], 1

</llo_original>
